<compile_context>
chip_gen: v7x
topology: tpu7x:2x2x1
jax: 0.10.0
libtpu: 0.0.40
codegen_flags: <defaults>
</compile_context>

<pallas_src>
import functools
import math

import jax
import jax.numpy as jnp
from jax.experimental import pallas as pl
from jax.experimental.pallas import tpu as pltpu

_MXU_DTYPE = jnp.bfloat16          # MXU operand dtype (accumulate in f32)
_LANE = 128                        # pad feature dims to this for lane-dense IO
_SUBLANE = 8                       # pad node dim to this
_VMEM_LIMIT = 48 * 1024 * 1024     # scoped-VMEM limit, fits v7x's 64 MiB core
_VMEM_BUDGET = 40 * 1024 * 1024    # working-set guard for the fused kernel


# ----------------------------------------------------------------------------
# Fused whole-forward kernel (ungridded: everything VMEM-resident)
# ----------------------------------------------------------------------------
def fused_gcn_kernel(x_ref, other_ref, ahat_ref, aeff_ref, w1_ref, w2_ref,
                     w3_ref, o_ref, *, alpha, beta, heterophily, k,
                     num_classes):
    f32 = jnp.float32
    bf = _MXU_DTYPE

    ahat = ahat_ref[...]                                   # [N, N] bf16
    aeff = aeff_ref[...]                                   # [N, N] bf16

    # conv1: relu(A_hat @ (x @ W1)); dropout == identity in eval mode.
    xw1 = jnp.dot(x_ref[...].astype(bf), w1_ref[...],
                  preferred_element_type=f32)
    x1 = jnp.maximum(jnp.dot(ahat, xw1.astype(bf),
                             preferred_element_type=f32), 0.0)
    # conv2: A_hat @ (x1 @ W2)
    xw2 = jnp.dot(x1.astype(bf), w2_ref[...], preferred_element_type=f32)
    x2 = jnp.dot(ahat, xw2.astype(bf), preferred_element_type=f32)

    # Diffusion: one MXU matmul per step.
    #   x <- alpha*h + (1-alpha-beta)*x + A_eff @ x
    # where A_eff folds beta*Ax + beta*gamma*Gx (with the surrogate gradient)
    # into a single cached propagation matrix (see host-side precompute).
    h = x2
    xk = x2
    for _ in range(k):                                     # static k, unrolled
        xk = (alpha * h + (1.0 - alpha - beta) * xk
              + jnp.dot(aeff, xk.astype(bf), preferred_element_type=f32))

    # otherEmbed blend + ReLU + lin3 + masked row log_softmax.
    a = heterophily * other_ref[...] + (1.0 - heterophily) * xk
    a = jnp.maximum(a, 0.0)
    logits = jnp.dot(a.astype(bf), w3_ref[...], preferred_element_type=f32)
    col = jax.lax.broadcasted_iota(jnp.int32, logits.shape, 1)
    logits = jnp.where(col < num_classes, logits, -1e30)   # mask lane padding
    m = jnp.max(logits, axis=1, keepdims=True)
    lse = m + jnp.log(jnp.sum(jnp.exp(logits - m), axis=1, keepdims=True))
    o_ref[...] = (logits - lse).astype(o_ref.dtype)


def simple_gcn_forward(x_p, other_p, a_hat, a_eff, w1, w2, w3, *,
                       alpha, beta, heterophily, k, num_classes, num_nodes):
    n_p, d_p = x_p.shape
    vmem = pl.BlockSpec(memory_space=pltpu.MemorySpace.VMEM)
    out_p = pl.pallas_call(
        functools.partial(fused_gcn_kernel, alpha=alpha, beta=beta,
                          heterophily=heterophily, k=k,
                          num_classes=num_classes),
        out_shape=jax.ShapeDtypeStruct((n_p, d_p), jnp.float32),
        in_specs=[vmem] * 7,
        out_specs=vmem,
        compiler_params=pltpu.CompilerParams(vmem_limit_bytes=_VMEM_LIMIT),
    )(x_p, other_p, a_hat, a_eff, w1, w2, w3)
    return out_p[:num_nodes, :num_classes]


# ----------------------------------------------------------------------------
# Host-side graph / parameter preparation (mirrors gcn_norm caching in torch)
# ----------------------------------------------------------------------------
def gcn_norm_dense(adj, add_self_loops):
    a = adj + jnp.eye(adj.shape[0], dtype=adj.dtype) if add_self_loops else adj
    deg = jnp.sum(a, axis=1)
    d_inv_sqrt = jnp.where(deg > 0, jax.lax.rsqrt(deg), 0.0)
    return a * d_inv_sqrt[:, None] * d_inv_sqrt[None, :]


def round_up(v, m):
    return ((v + m - 1) // m) * m


def pad_to(a, rows, cols):
    return jnp.pad(a, ((0, rows - a.shape[0]), (0, cols - a.shape[1])))


def glorot(key, shape):
    fan_in, fan_out = shape
    bound = math.sqrt(6.0 / (fan_in + fan_out))
    return jax.random.uniform(key, shape, jnp.float32, -bound, bound)


# ----------------------------------------------------------------------------
# Main
# ----------------------------------------------------------------------------
if __name__ == "__main__":
    key = jax.random.PRNGKey(0)
    N = 256                   # nodes
    num_features = 8
    hidden = 16               # args.hidden
    num_classes = 4
    k = 2                     # args.k (diffusion steps)
    alpha, beta, gamma = 0.1, 0.2, 0.5
    heterophily = 0.25

    kx, ka, ko, k1, k2, k3 = jax.random.split(key, 6)

    x = jax.random.normal(kx, (N, num_features), jnp.float32)
    other_embed = jax.random.normal(ko, (N, num_features), jnp.float32)

    # random symmetric binary adjacency (no self loops)
    r = jax.random.uniform(ka, (N, N), jnp.float32)
    adj = (r > 0.95).astype(jnp.float32)
    adj = jnp.maximum(adj, adj.T)
    adj = adj * (1.0 - jnp.eye(N, dtype=jnp.float32))

    # cached gcn_norm preprocessing (dense D^-1/2 (A[+I]) D^-1/2), f32
    a_hat = gcn_norm_dense(adj, add_self_loops=True)     # with self loops
    a2 = gcn_norm_dense(adj, add_self_loops=False)       # without self loops

    # TODO(synk): cal_g_gradient3 is not defined in the reference; we use the
    # graph-gradient surrogate g = A2 @ x - x (sigma1/sigma2 unused), so
    #   beta*Ax + beta*gamma*Gx == (beta*(1-gamma)*A_hat + beta*gamma*A_hat@A2) @ x
    # and each diffusion step collapses to one matmul against this cached
    # effective propagation matrix (precomputed like the gcn_norm cache).
    a_eff = beta * ((1.0 - gamma) * a_hat + gamma * (a_hat @ a2))

    # glorot weights: conv1 [F,H], conv2 [H,F], lin3 [F,C]
    w1 = glorot(k1, (num_features, hidden))
    w2 = glorot(k2, (hidden, num_features))
    w3 = glorot(k3, (num_features, num_classes))

    # Pad node dim to a sublane multiple and every feature dim to 128 lanes.
    # Padded rows/columns stay exactly zero through every linear / relu /
    # diffusion op, so valid outputs are unchanged; the padded class lanes are
    # masked inside the log-softmax.
    Np = round_up(N, _SUBLANE)
    D = _LANE
    x_p = pad_to(x, Np, D)
    other_p = pad_to(other_embed, Np, D)
    w1_p = pad_to(w1, D, D).astype(_MXU_DTYPE)
    w2_p = pad_to(w2, D, D).astype(_MXU_DTYPE)
    w3_p = pad_to(w3, D, D).astype(_MXU_DTYPE)
    a_hat_p = pad_to(a_hat, Np, Np).astype(_MXU_DTYPE)   # MXU-only -> bf16 HBM
    a_eff_p = pad_to(a_eff, Np, Np).astype(_MXU_DTYPE)

    # The fused kernel keeps the whole working set VMEM-resident.
    # TODO(synk): graphs too large for VMEM need a row/K-tiled multi-kernel
    # path (BlockSpec-pipelined matmuls); not required for this demo size.
    work_bytes = (2 * Np * Np * 2            # A_hat, A_eff (bf16)
                  + 3 * Np * D * 4           # x, otherEmbed, output (f32)
                  + 3 * D * D * 2)           # W1..W3 (bf16)
    assert work_bytes < _VMEM_BUDGET, work_bytes

    fwd = jax.jit(functools.partial(
        simple_gcn_forward, alpha=alpha, beta=beta, heterophily=heterophily,
        k=k, num_classes=num_classes, num_nodes=N))

    log_probs = fwd(x_p, other_p, a_hat_p, a_eff_p, w1_p, w2_p, w3_p)
    jax.block_until_ready(log_probs)

    assert log_probs.shape == (N, num_classes)
    # rows of log-probabilities must exponentiate-and-sum to ~1
    assert jnp.allclose(jnp.sum(jnp.exp(log_probs), axis=1), 1.0, atol=1e-3)
    print("KERNEL_OK")
</pallas_src>

<mosaic_0001>
module attributes {stable_mosaic.version = 11 : i64} {
  func.func @fused_gcn_kernel(%arg0: memref<256x128xf32, #tpu.memory_space<vmem>>, %arg1: memref<256x128xf32, #tpu.memory_space<vmem>>, %arg2: memref<256x256xbf16, #tpu.memory_space<vmem>>, %arg3: memref<256x256xbf16, #tpu.memory_space<vmem>>, %arg4: memref<128x128xbf16, #tpu.memory_space<vmem>>, %arg5: memref<128x128xbf16, #tpu.memory_space<vmem>>, %arg6: memref<128x128xbf16, #tpu.memory_space<vmem>>, %arg7: memref<256x128xf32, #tpu.memory_space<vmem>>) attributes {dimension_semantics = [], scalar_prefetch = 0 : i64, scratch_operands = 0 : i64, tpu.core_type = #tpu.core_type<tc>} {
    %c0 = arith.constant 0 : index
    %c0_0 = arith.constant 0 : index
    %0 = vector.load %arg2[%c0, %c0_0] : memref<256x256xbf16, #tpu.memory_space<vmem>>, vector<256x256xbf16>
    %c0_1 = arith.constant 0 : index
    %c0_2 = arith.constant 0 : index
    %1 = vector.load %arg3[%c0_1, %c0_2] : memref<256x256xbf16, #tpu.memory_space<vmem>>, vector<256x256xbf16>
    %c0_3 = arith.constant 0 : index
    %c0_4 = arith.constant 0 : index
    %2 = vector.load %arg0[%c0_3, %c0_4] : memref<256x128xf32, #tpu.memory_space<vmem>>, vector<256x128xf32>
    %3 = arith.truncf %2 : vector<256x128xf32> to vector<256x128xbf16>
    %c0_5 = arith.constant 0 : index
    %c0_6 = arith.constant 0 : index
    %4 = vector.load %arg4[%c0_5, %c0_6] : memref<128x128xbf16, #tpu.memory_space<vmem>>, vector<128x128xbf16>
    %cst = arith.constant dense<0.000000e+00> : vector<256x128xf32>
    %5 = tpu.matmul %3, %4, %cst {dimension_numbers = #tpu.dot_dimension_numbers<[1], [0], [0], [1], [0, 0, 1, 1], [], []>} : vector<256x128xbf16>, vector<128x128xbf16>, vector<256x128xf32> -> vector<256x128xf32>
    %6 = arith.truncf %5 : vector<256x128xf32> to vector<256x128xbf16>
    %cst_7 = arith.constant dense<0.000000e+00> : vector<256x128xf32>
    %7 = tpu.matmul %0, %6, %cst_7 {dimension_numbers = #tpu.dot_dimension_numbers<[1], [0], [0], [1], [0, 0, 1, 1], [], []>} : vector<256x256xbf16>, vector<256x128xbf16>, vector<256x128xf32> -> vector<256x128xf32>
    %cst_8 = arith.constant 0.000000e+00 : f32
    %8 = vector.broadcast %cst_8 : f32 to vector<256x128xf32>
    %9 = arith.maximumf %7, %8 : vector<256x128xf32>
    %10 = arith.truncf %9 : vector<256x128xf32> to vector<256x128xbf16>
    %c0_9 = arith.constant 0 : index
    %c0_10 = arith.constant 0 : index
    %11 = vector.load %arg5[%c0_9, %c0_10] : memref<128x128xbf16, #tpu.memory_space<vmem>>, vector<128x128xbf16>
    %cst_11 = arith.constant dense<0.000000e+00> : vector<256x128xf32>
    %12 = tpu.matmul %10, %11, %cst_11 {dimension_numbers = #tpu.dot_dimension_numbers<[1], [0], [0], [1], [0, 0, 1, 1], [], []>} : vector<256x128xbf16>, vector<128x128xbf16>, vector<256x128xf32> -> vector<256x128xf32>
    %13 = arith.truncf %12 : vector<256x128xf32> to vector<256x128xbf16>
    %cst_12 = arith.constant dense<0.000000e+00> : vector<256x128xf32>
    %14 = tpu.matmul %0, %13, %cst_12 {dimension_numbers = #tpu.dot_dimension_numbers<[1], [0], [0], [1], [0, 0, 1, 1], [], []>} : vector<256x256xbf16>, vector<256x128xbf16>, vector<256x128xf32> -> vector<256x128xf32>
    %cst_13 = arith.constant 1.000000e-01 : f32
    %15 = vector.broadcast %cst_13 : f32 to vector<256x128xf32>
    %16 = arith.mulf %15, %14 : vector<256x128xf32>
    %cst_14 = arith.constant 0.699999988 : f32
    %17 = vector.broadcast %cst_14 : f32 to vector<256x128xf32>
    %18 = arith.mulf %17, %14 : vector<256x128xf32>
    %19 = arith.addf %16, %18 : vector<256x128xf32>
    %20 = arith.truncf %14 : vector<256x128xf32> to vector<256x128xbf16>
    %cst_15 = arith.constant dense<0.000000e+00> : vector<256x128xf32>
    %21 = tpu.matmul %1, %20, %cst_15 {dimension_numbers = #tpu.dot_dimension_numbers<[1], [0], [0], [1], [0, 0, 1, 1], [], []>} : vector<256x256xbf16>, vector<256x128xbf16>, vector<256x128xf32> -> vector<256x128xf32>
    %22 = arith.addf %19, %21 : vector<256x128xf32>
    %cst_16 = arith.constant 1.000000e-01 : f32
    %23 = vector.broadcast %cst_16 : f32 to vector<256x128xf32>
    %24 = arith.mulf %23, %14 : vector<256x128xf32>
    %cst_17 = arith.constant 0.699999988 : f32
    %25 = vector.broadcast %cst_17 : f32 to vector<256x128xf32>
    %26 = arith.mulf %25, %22 : vector<256x128xf32>
    %27 = arith.addf %24, %26 : vector<256x128xf32>
    %28 = arith.truncf %22 : vector<256x128xf32> to vector<256x128xbf16>
    %cst_18 = arith.constant dense<0.000000e+00> : vector<256x128xf32>
    %29 = tpu.matmul %1, %28, %cst_18 {dimension_numbers = #tpu.dot_dimension_numbers<[1], [0], [0], [1], [0, 0, 1, 1], [], []>} : vector<256x256xbf16>, vector<256x128xbf16>, vector<256x128xf32> -> vector<256x128xf32>
    %30 = arith.addf %27, %29 : vector<256x128xf32>
    %c0_19 = arith.constant 0 : index
    %c0_20 = arith.constant 0 : index
    %31 = vector.load %arg1[%c0_19, %c0_20] : memref<256x128xf32, #tpu.memory_space<vmem>>, vector<256x128xf32>
    %cst_21 = arith.constant 2.500000e-01 : f32
    %32 = vector.broadcast %cst_21 : f32 to vector<256x128xf32>
    %33 = arith.mulf %32, %31 : vector<256x128xf32>
    %cst_22 = arith.constant 7.500000e-01 : f32
    %34 = vector.broadcast %cst_22 : f32 to vector<256x128xf32>
    %35 = arith.mulf %34, %30 : vector<256x128xf32>
    %36 = arith.addf %33, %35 : vector<256x128xf32>
    %cst_23 = arith.constant 0.000000e+00 : f32
    %37 = vector.broadcast %cst_23 : f32 to vector<256x128xf32>
    %38 = arith.maximumf %36, %37 : vector<256x128xf32>
    %39 = arith.truncf %38 : vector<256x128xf32> to vector<256x128xbf16>
    %c0_24 = arith.constant 0 : index
    %c0_25 = arith.constant 0 : index
    %40 = vector.load %arg6[%c0_24, %c0_25] : memref<128x128xbf16, #tpu.memory_space<vmem>>, vector<128x128xbf16>
    %cst_26 = arith.constant dense<0.000000e+00> : vector<256x128xf32>
    %41 = tpu.matmul %39, %40, %cst_26 {dimension_numbers = #tpu.dot_dimension_numbers<[1], [0], [0], [1], [0, 0, 1, 1], [], []>} : vector<256x128xbf16>, vector<128x128xbf16>, vector<256x128xf32> -> vector<256x128xf32>
    %42 = tpu.iota {dimensions = array<i32: 1>} : vector<256x128xi32>
    %c4_i32 = arith.constant 4 : i32
    %43 = vector.broadcast %c4_i32 : i32 to vector<256x128xi32>
    %44 = arith.cmpi slt, %42, %43 : vector<256x128xi32>
    %cst_27 = arith.constant -1.000000e+30 : f32
    %45 = vector.broadcast %cst_27 : f32 to vector<256x128xf32>
    %46 = arith.select %44, %41, %45 : vector<256x128xi1>, vector<256x128xf32>
    %cst_28 = arith.constant dense<0xFF800000> : vector<256xf32>
    %47 = vector.multi_reduction <maximumf>, %46, %cst_28 [1] : vector<256x128xf32> to vector<256xf32>
    %48 = vector.shape_cast %47 : vector<256xf32> to vector<256x1xf32>
    %49 = vector.broadcast %48 : vector<256x1xf32> to vector<256x128xf32>
    %50 = arith.subf %46, %49 : vector<256x128xf32>
    %51 = math.exp %50 : vector<256x128xf32>
    %cst_29 = arith.constant dense<0.000000e+00> : vector<256xf32>
    %52 = vector.multi_reduction <add>, %51, %cst_29 [1] : vector<256x128xf32> to vector<256xf32>
    %53 = vector.shape_cast %52 : vector<256xf32> to vector<256x1xf32>
    %54 = math.log %53 : vector<256x1xf32>
    %55 = arith.addf %48, %54 : vector<256x1xf32>
    %56 = vector.broadcast %55 : vector<256x1xf32> to vector<256x128xf32>
    %57 = arith.subf %46, %56 : vector<256x128xf32>
    %c0_30 = arith.constant 0 : index
    %c0_31 = arith.constant 0 : index
    %58 = vector.load %arg7[%c0_30, %c0_31] : memref<256x128xf32, #tpu.memory_space<vmem>>, vector<256x128xf32>
    tpu.vector_store %arg7[%c0_30, %c0_31], %57 {strides = array<i32>} : memref<256x128xf32, #tpu.memory_space<vmem>>, vector<256x128xf32>,
    return
  }
}

</mosaic_0001>

<llo_original>
// kernel: simple_gcn_forward.1
$region0: #{simple_gcn_forward.1}
  #allocation0 [shape = 'u32[]', space=smem, size = 0x4, offset = 0x4, fixed_abs, tag = 'smem constant byte address 0x4 - core index']
  #allocation1 [shape = 'u32[144,128]{1,0:T(1,128)}', space=vmem, size = 0x12000, scoped, tag = 'internal scratch']
  %s0 = inlined_call_operand.hbm [shape: f32[256,128], index: 0, kind: input, shape index: {}]
  %s1 = inlined_call_operand.hbm [shape: f32[256,128], index: 1, kind: input, shape index: {}]
  %s2 = inlined_call_operand.hbm [shape: bf16[256,256], index: 2, kind: input, shape index: {}]
  %s3 = inlined_call_operand.hbm [shape: bf16[256,256], index: 3, kind: input, shape index: {}]
  %s4 = inlined_call_operand.hbm [shape: bf16[128,128], index: 4, kind: input, shape index: {}]
  %s5 = inlined_call_operand.hbm [shape: bf16[128,128], index: 5, kind: input, shape index: {}]
  %s6 = inlined_call_operand.hbm [shape: bf16[128,128], index: 6, kind: input, shape index: {}]
  %s7 = inlined_call_operand.vmem [shape: f32[256,128], index: 7, kind: output, shape index: {}]
  %s8 = sld [smem:[#allocation0]]
  $region66: #{simple_gcn_forward.1} parent=0
    _
  %s10 = ssub.s32 1, %s8
  %s11 = scalar_select 0, %s10, %s8
  $region1: #{simple_gcn_forward.1} parent=0
    #allocation2 [shape = 'u8[131072]{0}', space=vmem, size = 0x20000, scoped, tag = 'input window, operand 0, single buffered']
    #allocation3 [shape = 's32[1]{0}', space=sflag, size = 0x4, scoped, tag = 'scoped memory for simple_gcn_forward.1']
    #allocation4 [shape = 'u8[131072]{0}', space=vmem, size = 0x20000, scoped, tag = 'input window, operand 1, single buffered']
    #allocation5 [shape = 's32[1]{0}', space=sflag, size = 0x4, scoped, tag = 'scoped memory for simple_gcn_forward.1']
    #allocation6 [shape = 'u8[131072]{0}', space=vmem, size = 0x20000, scoped, tag = 'input window, operand 2, single buffered']
    #allocation7 [shape = 'u8[131072]{0}', space=vmem, size = 0x20000, scoped, tag = 'input window, operand 3, single buffered']
    #allocation8 [shape = 's32[1]{0}', space=sflag, size = 0x4, scoped, tag = 'scoped memory for simple_gcn_forward.1']
    #allocation9 [shape = 'u8[32768]{0}', space=vmem, size = 0x8000, scoped, tag = 'input window, operand 4, single buffered']
    #allocation10 [shape = 'u8[32768]{0}', space=vmem, size = 0x8000, scoped, tag = 'input window, operand 5, single buffered']
    #allocation11 [shape = 's32[1]{0}', space=sflag, size = 0x4, scoped, tag = 'scoped memory for simple_gcn_forward.1']
    #allocation12 [shape = 'u8[32768]{0}', space=vmem, size = 0x8000, scoped, tag = 'input window, operand 6, single buffered']
    %12 = vsyncpa [#allocation3], 0
    %13 = vsyncpa [#allocation5], 0
    %14 = vsyncpa [#allocation8], 0
    %15 = vsyncpa [#allocation11], 0
    // Predicated region
    $region2: #{simple_gcn_forward.1} parent=1 // pred_check
      _
    $region3: #{simple_gcn_forward.1} parent=1 // pred_check_branch
      %17 = sbr.rel (0) target = $region5
    $region4: #{simple_gcn_forward.1} parent=1 // pred_region
      %s19 = ssub.s32 4096, 4096
      %20 = vsyncadd [#allocation3], %s19
      %s21 = sshll.u32 [#allocation2], 4
      %s22 = int_to_ptr.vmem [resolvable:$true] %s21
      %27 = dma.hbm_to_vmem [thread:$0]  %s0, 4096, %s22, [#allocation3], 128, 128, 8
    $region5: #{simple_gcn_forward.1} parent=1 // pred_fallthru
      _
    // Predicated region
    $region6: #{simple_gcn_forward.1} parent=1 // pred_check
      _
    $region7: #{simple_gcn_forward.1} parent=1 // pred_check_branch
      %29 = sbr.rel (0) target = $region9
    $region8: #{simple_gcn_forward.1} parent=1 // pred_region
      %s31 = ssub.s32 4096, 4096
      %32 = vsyncadd [#allocation5], %s31
      %s33 = sshll.u32 [#allocation4], 4
      %s34 = int_to_ptr.vmem [resolvable:$true] %s33
      %39 = dma.hbm_to_vmem [thread:$0]  %s1, 4096, %s34, [#allocation5], 128, 128, 8
    $region9: #{simple_gcn_forward.1} parent=1 // pred_fallthru
      _
    // Predicated region
    $region10: #{simple_gcn_forward.1} parent=1 // pred_check
      _
    $region11: #{simple_gcn_forward.1} parent=1 // pred_check_branch
      %41 = sbr.rel (0) target = $region13
    $region12: #{simple_gcn_forward.1} parent=1 // pred_region
      %s43 = ssub.s32 4096, 4096
      %44 = vsyncadd [#allocation5], %s43
      %s45 = sshll.u32 [#allocation6], 4
      %s46 = int_to_ptr.vmem [resolvable:$true] %s45
      %51 = dma.hbm_to_vmem [thread:$0]  %s2, 4096, %s46, [#allocation5], 128, 128, 8
    $region13: #{simple_gcn_forward.1} parent=1 // pred_fallthru
      _
    // Predicated region
    $region14: #{simple_gcn_forward.1} parent=1 // pred_check
      _
    $region15: #{simple_gcn_forward.1} parent=1 // pred_check_branch
      %53 = sbr.rel (0) target = $region17
    $region16: #{simple_gcn_forward.1} parent=1 // pred_region
      %s55 = ssub.s32 4096, 4096
      %56 = vsyncadd [#allocation8], %s55
      %s57 = sshll.u32 [#allocation7], 4
      %s58 = int_to_ptr.vmem [resolvable:$true] %s57
      %63 = dma.hbm_to_vmem [thread:$0]  %s3, 4096, %s58, [#allocation8], 128, 128, 8
    $region17: #{simple_gcn_forward.1} parent=1 // pred_fallthru
      _
    // Predicated region
    $region18: #{simple_gcn_forward.1} parent=1 // pred_check
      _
    $region19: #{simple_gcn_forward.1} parent=1 // pred_check_branch
      %65 = sbr.rel (0) target = $region21
    $region20: #{simple_gcn_forward.1} parent=1 // pred_region
      %s67 = ssub.s32 1024, 1024
      %68 = vsyncadd [#allocation8], %s67
      %s69 = sshll.u32 [#allocation9], 4
      %s70 = int_to_ptr.vmem [resolvable:$true] %s69
      %75 = dma.hbm_to_vmem [thread:$0]  %s4, 1024, %s70, [#allocation8], 64, 64, 4
    $region21: #{simple_gcn_forward.1} parent=1 // pred_fallthru
      _
    // Predicated region
    $region22: #{simple_gcn_forward.1} parent=1 // pred_check
      _
    $region23: #{simple_gcn_forward.1} parent=1 // pred_check_branch
      %77 = sbr.rel (0) target = $region25
    $region24: #{simple_gcn_forward.1} parent=1 // pred_region
      %s79 = ssub.s32 1024, 1024
      %80 = vsyncadd [#allocation11], %s79
      %s81 = sshll.u32 [#allocation10], 4
      %s82 = int_to_ptr.vmem [resolvable:$true] %s81
      %87 = dma.hbm_to_vmem [thread:$0]  %s5, 1024, %s82, [#allocation11], 64, 64, 4
    $region25: #{simple_gcn_forward.1} parent=1 // pred_fallthru
      _
    // Predicated region
    $region26: #{simple_gcn_forward.1} parent=1 // pred_check
      _
    $region27: #{simple_gcn_forward.1} parent=1 // pred_check_branch
      %89 = sbr.rel (0) target = $region29
    $region28: #{simple_gcn_forward.1} parent=1 // pred_region
      %s91 = ssub.s32 1024, 1024
      %92 = vsyncadd [#allocation11], %s91
      %s93 = sshll.u32 [#allocation12], 4
      %s94 = int_to_ptr.vmem [resolvable:$true] %s93
      %99 = dma.hbm_to_vmem [thread:$0]  %s6, 1024, %s94, [#allocation11], 64, 64, 4
    $region29: #{simple_gcn_forward.1} parent=1 // pred_fallthru
      _
    // Predicated region
    $region30: #{simple_gcn_forward.1} parent=1 // pred_check
      _
    $region31: #{simple_gcn_forward.1} parent=1 // pred_check_branch
      %101 = sbr.rel (0) target = $region33
    $region32: #{simple_gcn_forward.1} parent=1 // pred_region
      %102 = dma.done [#allocation3], 4096
    $region33: #{simple_gcn_forward.1} parent=1 // pred_fallthru
      _
    // Predicated region
    $region34: #{simple_gcn_forward.1} parent=1 // pred_check
      _
    $region35: #{simple_gcn_forward.1} parent=1 // pred_check_branch
      %104 = sbr.rel (0) target = $region37
    $region36: #{simple_gcn_forward.1} parent=1 // pred_region
      %105 = dma.done [#allocation5], 4096
    $region37: #{simple_gcn_forward.1} parent=1 // pred_fallthru
      _
    // Predicated region
    $region38: #{simple_gcn_forward.1} parent=1 // pred_check
      _
    $region39: #{simple_gcn_forward.1} parent=1 // pred_check_branch
      %107 = sbr.rel (0) target = $region41
    $region40: #{simple_gcn_forward.1} parent=1 // pred_region
      %108 = dma.done [#allocation5], 4096
    $region41: #{simple_gcn_forward.1} parent=1 // pred_fallthru
      _
    // Predicated region
    $region42: #{simple_gcn_forward.1} parent=1 // pred_check
      _
    $region43: #{simple_gcn_forward.1} parent=1 // pred_check_branch
      %110 = sbr.rel (0) target = $region45
    $region44: #{simple_gcn_forward.1} parent=1 // pred_region
      %111 = dma.done [#allocation8], 4096
    $region45: #{simple_gcn_forward.1} parent=1 // pred_fallthru
      _
    // Predicated region
    $region46: #{simple_gcn_forward.1} parent=1 // pred_check
      _
    $region47: #{simple_gcn_forward.1} parent=1 // pred_check_branch
      %113 = sbr.rel (0) target = $region49
    $region48: #{simple_gcn_forward.1} parent=1 // pred_region
      %114 = dma.done [#allocation8], 1024
    $region49: #{simple_gcn_forward.1} parent=1 // pred_fallthru
      _
    // Predicated region
    $region50: #{simple_gcn_forward.1} parent=1 // pred_check
      _
    $region51: #{simple_gcn_forward.1} parent=1 // pred_check_branch
      %116 = sbr.rel (0) target = $region53
    $region52: #{simple_gcn_forward.1} parent=1 // pred_region
      %117 = dma.done [#allocation11], 1024
    $region53: #{simple_gcn_forward.1} parent=1 // pred_fallthru
      _
    // Predicated region
    $region54: #{simple_gcn_forward.1} parent=1 // pred_check
      _
    $region55: #{simple_gcn_forward.1} parent=1 // pred_check_branch
      %119 = sbr.rel (0) target = $region57
    $region56: #{simple_gcn_forward.1} parent=1 // pred_region
      %120 = dma.done [#allocation11], 1024
    $region57: #{simple_gcn_forward.1} parent=1 // pred_fallthru
      _
    %v122 = vld [vmem:[#allocation6] sm:$0xff]
    %v123 = vld [vmem:[#allocation6 + $0x8] sm:$0xff]
    %v124 = vld [vmem:[#allocation6 + $0x10] sm:$0xff]
    %v125 = vld [vmem:[#allocation6 + $0x18] sm:$0xff]
    %v126 = vld [vmem:[#allocation6 + $0x20] sm:$0xff]
    %v127 = vld [vmem:[#allocation6 + $0x28] sm:$0xff]
    %v128 = vld [vmem:[#allocation6 + $0x30] sm:$0xff]
    %v129 = vld [vmem:[#allocation6 + $0x38] sm:$0xff]
    %v130 = vld [vmem:[#allocation6 + $0x40] sm:$0xff]
    %v131 = vld [vmem:[#allocation6 + $0x48] sm:$0xff]
    %v132 = vld [vmem:[#allocation6 + $0x50] sm:$0xff]
    %v133 = vld [vmem:[#allocation6 + $0x58] sm:$0xff]
    %v134 = vld [vmem:[#allocation6 + $0x60] sm:$0xff]
    %v135 = vld [vmem:[#allocation6 + $0x68] sm:$0xff]
    %v136 = vld [vmem:[#allocation6 + $0x70] sm:$0xff]
    %v137 = vld [vmem:[#allocation6 + $0x78] sm:$0xff]
    %v138 = vld [vmem:[#allocation6 + $0x80] sm:$0xff]
    %v139 = vld [vmem:[#allocation6 + $0x88] sm:$0xff]
    %v140 = vld [vmem:[#allocation6 + $0x90] sm:$0xff]
    %v141 = vld [vmem:[#allocation6 + $0x98] sm:$0xff]
    %v142 = vld [vmem:[#allocation6 + $0xa0] sm:$0xff]
    %v143 = vld [vmem:[#allocation6 + $0xa8] sm:$0xff]
    %v144 = vld [vmem:[#allocation6 + $0xb0] sm:$0xff]
    %v145 = vld [vmem:[#allocation6 + $0xb8] sm:$0xff]
    %v146 = vld [vmem:[#allocation6 + $0xc0] sm:$0xff]
    %v147 = vld [vmem:[#allocation6 + $0xc8] sm:$0xff]
    %v148 = vld [vmem:[#allocation6 + $0xd0] sm:$0xff]
    %v149 = vld [vmem:[#allocation6 + $0xd8] sm:$0xff]
    %v150 = vld [vmem:[#allocation6 + $0xe0] sm:$0xff]
    %v151 = vld [vmem:[#allocation6 + $0xe8] sm:$0xff]
    %v152 = vld [vmem:[#allocation6 + $0xf0] sm:$0xff]
    %v153 = vld [vmem:[#allocation6 + $0xf8] sm:$0xff]
    %v154 = vld [vmem:[#allocation7] sm:$0xff]
    %v155 = vld [vmem:[#allocation7 + $0x8] sm:$0xff]
    %v156 = vld [vmem:[#allocation7 + $0x10] sm:$0xff]
    %v157 = vld [vmem:[#allocation7 + $0x18] sm:$0xff]
    %v158 = vld [vmem:[#allocation7 + $0x20] sm:$0xff]
    %v159 = vld [vmem:[#allocation7 + $0x28] sm:$0xff]
    %v160 = vld [vmem:[#allocation7 + $0x30] sm:$0xff]
    %v161 = vld [vmem:[#allocation7 + $0x38] sm:$0xff]
    %v162 = vld [vmem:[#allocation7 + $0x40] sm:$0xff]
    %v163 = vld [vmem:[#allocation7 + $0x48] sm:$0xff]
    %v164 = vld [vmem:[#allocation7 + $0x50] sm:$0xff]
    %v165 = vld [vmem:[#allocation7 + $0x58] sm:$0xff]
    %v166 = vld [vmem:[#allocation7 + $0x60] sm:$0xff]
    %v167 = vld [vmem:[#allocation7 + $0x68] sm:$0xff]
    %v168 = vld [vmem:[#allocation7 + $0x70] sm:$0xff]
    %v169 = vld [vmem:[#allocation7 + $0x78] sm:$0xff]
    %v170 = vld [vmem:[#allocation7 + $0x80] sm:$0xff]
    %v171 = vld [vmem:[#allocation7 + $0x88] sm:$0xff]
    %v172 = vld [vmem:[#allocation7 + $0x90] sm:$0xff]
    %v173 = vld [vmem:[#allocation7 + $0x98] sm:$0xff]
    %v174 = vld [vmem:[#allocation7 + $0xa0] sm:$0xff]
    %v175 = vld [vmem:[#allocation7 + $0xa8] sm:$0xff]
    %v176 = vld [vmem:[#allocation7 + $0xb0] sm:$0xff]
    %v177 = vld [vmem:[#allocation7 + $0xb8] sm:$0xff]
    %v178 = vld [vmem:[#allocation7 + $0xc0] sm:$0xff]
    %v179 = vld [vmem:[#allocation7 + $0xc8] sm:$0xff]
    %v180 = vld [vmem:[#allocation7 + $0xd0] sm:$0xff]
    %v181 = vld [vmem:[#allocation7 + $0xd8] sm:$0xff]
    %v182 = vld [vmem:[#allocation7 + $0xe0] sm:$0xff]
    %v183 = vld [vmem:[#allocation7 + $0xe8] sm:$0xff]
    %v184 = vld [vmem:[#allocation7 + $0xf0] sm:$0xff]
    %v185 = vld [vmem:[#allocation7 + $0xf8] sm:$0xff]
    %v186 = vld [vmem:[#allocation2] sm:$0xff]
    %v187 = vld [vmem:[#allocation2 + $0x8] sm:$0xff]
    %v188 = vld [vmem:[#allocation2 + $0x10] sm:$0xff]
    %v189 = vld [vmem:[#allocation2 + $0x18] sm:$0xff]
    %v190 = vld [vmem:[#allocation2 + $0x20] sm:$0xff]
    %v191 = vld [vmem:[#allocation2 + $0x28] sm:$0xff]
    %v192 = vld [vmem:[#allocation2 + $0x30] sm:$0xff]
    %v193 = vld [vmem:[#allocation2 + $0x38] sm:$0xff]
    %v194 = vld [vmem:[#allocation2 + $0x40] sm:$0xff]
    %v195 = vld [vmem:[#allocation2 + $0x48] sm:$0xff]
    %v196 = vld [vmem:[#allocation2 + $0x50] sm:$0xff]
    %v197 = vld [vmem:[#allocation2 + $0x58] sm:$0xff]
    %v198 = vld [vmem:[#allocation2 + $0x60] sm:$0xff]
    %v199 = vld [vmem:[#allocation2 + $0x68] sm:$0xff]
    %v200 = vld [vmem:[#allocation2 + $0x70] sm:$0xff]
    %v201 = vld [vmem:[#allocation2 + $0x78] sm:$0xff]
    %v202 = vld [vmem:[#allocation2 + $0x80] sm:$0xff]
    %v203 = vld [vmem:[#allocation2 + $0x88] sm:$0xff]
    %v204 = vld [vmem:[#allocation2 + $0x90] sm:$0xff]
    %v205 = vld [vmem:[#allocation2 + $0x98] sm:$0xff]
    %v206 = vld [vmem:[#allocation2 + $0xa0] sm:$0xff]
    %v207 = vld [vmem:[#allocation2 + $0xa8] sm:$0xff]
    %v208 = vld [vmem:[#allocation2 + $0xb0] sm:$0xff]
    %v209 = vld [vmem:[#allocation2 + $0xb8] sm:$0xff]
    %v210 = vld [vmem:[#allocation2 + $0xc0] sm:$0xff]
    %v211 = vld [vmem:[#allocation2 + $0xc8] sm:$0xff]
    %v212 = vld [vmem:[#allocation2 + $0xd0] sm:$0xff]
    %v213 = vld [vmem:[#allocation2 + $0xd8] sm:$0xff]
    %v214 = vld [vmem:[#allocation2 + $0xe0] sm:$0xff]
    %v215 = vld [vmem:[#allocation2 + $0xe8] sm:$0xff]
    %v216 = vld [vmem:[#allocation2 + $0xf0] sm:$0xff]
    %v217 = vld [vmem:[#allocation2 + $0xf8] sm:$0xff]
    %v218 = vpack.c.bf16 %v187, %v186
    %v219 = vpack.c.bf16 %v189, %v188
    %v220 = vpack.c.bf16 %v191, %v190
    %v221 = vpack.c.bf16 %v193, %v192
    %v222 = vpack.c.bf16 %v195, %v194
    %v223 = vpack.c.bf16 %v197, %v196
    %v224 = vpack.c.bf16 %v199, %v198
    %v225 = vpack.c.bf16 %v201, %v200
    %v226 = vpack.c.bf16 %v203, %v202
    %v227 = vpack.c.bf16 %v205, %v204
    %v228 = vpack.c.bf16 %v207, %v206
    %v229 = vpack.c.bf16 %v209, %v208
    %v230 = vpack.c.bf16 %v211, %v210
    %v231 = vpack.c.bf16 %v213, %v212
    %v232 = vpack.c.bf16 %v215, %v214
    %v233 = vpack.c.bf16 %v217, %v216
    %v234 = vld [vmem:[#allocation9] sm:$0xf]
    %v235 = vld [vmem:[#allocation9 + $0x4] sm:$0xf]
    %v236 = vld [vmem:[#allocation9 + $0x8] sm:$0xf]
    %v237 = vld [vmem:[#allocation9 + $0xc] sm:$0xf]
    %v238 = vld [vmem:[#allocation9 + $0x10] sm:$0xf]
    %v239 = vld [vmem:[#allocation9 + $0x14] sm:$0xf]
    %v240 = vld [vmem:[#allocation9 + $0x18] sm:$0xf]
    %v241 = vld [vmem:[#allocation9 + $0x1c] sm:$0xf]
    %v242 = vld [vmem:[#allocation9 + $0x20] sm:$0xf]
    %v243 = vld [vmem:[#allocation9 + $0x24] sm:$0xf]
    %v244 = vld [vmem:[#allocation9 + $0x28] sm:$0xf]
    %v245 = vld [vmem:[#allocation9 + $0x2c] sm:$0xf]
    %v246 = vld [vmem:[#allocation9 + $0x30] sm:$0xf]
    %v247 = vld [vmem:[#allocation9 + $0x34] sm:$0xf]
    %v248 = vld [vmem:[#allocation9 + $0x38] sm:$0xf]
    %v249 = vld [vmem:[#allocation9 + $0x3c] sm:$0xf]
    %v266 = vunpack.c.l.b16 %v234
    %v267 = vunpack.c.l.b16 %v235
    %v268 = vunpack.c.l.b16 %v236
    %v269 = vunpack.c.l.b16 %v237
    %v270 = vunpack.c.l.b16 %v238
    %v271 = vunpack.c.l.b16 %v239
    %v272 = vunpack.c.l.b16 %v240
    %v273 = vunpack.c.l.b16 %v241
    %v274 = vunpack.c.l.b16 %v242
    %v275 = vunpack.c.l.b16 %v243
    %v276 = vunpack.c.l.b16 %v244
    %v277 = vunpack.c.l.b16 %v245
    %v278 = vunpack.c.l.b16 %v246
    %v279 = vunpack.c.l.b16 %v247
    %v280 = vunpack.c.l.b16 %v248
    %v281 = vunpack.c.l.b16 %v249
    %v282 = vpack.c.b16 %v267, %v266
    %v283 = vpack.c.b16 %v269, %v268
    %v284 = vpack.c.b16 %v271, %v270
    %v285 = vpack.c.b16 %v273, %v272
    %v286 = vpack.c.b16 %v275, %v274
    %v287 = vpack.c.b16 %v277, %v276
    %v288 = vpack.c.b16 %v279, %v278
    %v289 = vpack.c.b16 %v281, %v280
    %298 = vmatprep.subr.bf16.mxu0 0
    %299 = vmatpush1.bf16.msra.mxu0 %v282
    %300 = vmatprep.subr.bf16.mxu0 0
    %301 = vmatpush1.bf16.msra.mxu0 %v283
    %302 = vmatprep.subr.bf16.mxu0 0
    %303 = vmatpush1.bf16.msra.mxu0 %v284
    %304 = vmatprep.subr.bf16.mxu0 0
    %305 = vmatpush1.bf16.msra.mxu0 %v285
    %306 = vmatprep.subr.bf16.mxu0 0
    %307 = vmatpush1.bf16.msra.mxu0 %v286
    %308 = vmatprep.subr.bf16.mxu0 0
    %309 = vmatpush1.bf16.msra.mxu0 %v287
    %310 = vmatprep.subr.bf16.mxu0 0
    %311 = vmatpush1.bf16.msra.mxu0 %v288
    %312 = vmatprep.subr.bf16.mxu0 0
    %313 = vmatpush1.bf16.msra.mxu0 %v289
    %314 = vmatprep.subr.bf16.mxu0 0
    %315 = vmatpush1.bf16.msra.mxu0 0
    %316 = vmatprep.subr.bf16.mxu0 0
    %317 = vmatpush1.bf16.msra.mxu0 0
    %318 = vmatprep.subr.bf16.mxu0 0
    %319 = vmatpush1.bf16.msra.mxu0 0
    %320 = vmatprep.subr.bf16.mxu0 0
    %321 = vmatpush1.bf16.msra.mxu0 0
    %322 = vmatprep.subr.bf16.mxu0 0
    %323 = vmatpush1.bf16.msra.mxu0 0
    %324 = vmatprep.subr.bf16.mxu0 0
    %325 = vmatpush1.bf16.msra.mxu0 0
    %326 = vmatprep.subr.bf16.mxu0 0
    %327 = vmatpush1.bf16.msra.mxu0 0
    %328 = vmatprep.subr.bf16.mxu0 0
    %329 = vmatpush1.bf16.msra.mxu0 0
    %330 = vmatprep.mubr.bf16.mxu0 0
    %331 = vmatmul.mubr.bf16.gmra.mrb[0].mxu0 %v218
    %v332 = vpop.f32.mrb[0].mxu0
    %v333 = vadd.f32 0.0, %v332
    %v334 = vpop.f32.mrb[0].mxu0
    %v335 = vpop.f32.mrb[0].mxu0
    %v336 = vadd.f32 0.0, %v335
    %v337 = vpop.f32.mrb[0].mxu0
    %338 = vmatprep.mubr.bf16.mxu0 0
    %339 = vmatmul.mubr.bf16.gmra.mrb[0].mxu0 %v219
    %v340 = vpop.f32.mrb[0].mxu0
    %v341 = vadd.f32 0.0, %v340
    %v342 = vpop.f32.mrb[0].mxu0
    %v343 = vpop.f32.mrb[0].mxu0
    %v344 = vadd.f32 0.0, %v343
    %v345 = vpop.f32.mrb[0].mxu0
    %346 = vmatprep.mubr.bf16.mxu0 0
    %347 = vmatmul.mubr.bf16.gmra.mrb[0].mxu0 %v220
    %v348 = vpop.f32.mrb[0].mxu0
    %v349 = vadd.f32 0.0, %v348
    %v350 = vpop.f32.mrb[0].mxu0
    %v351 = vpop.f32.mrb[0].mxu0
    %v352 = vadd.f32 0.0, %v351
    %v353 = vpop.f32.mrb[0].mxu0
    %354 = vmatprep.mubr.bf16.mxu0 0
    %355 = vmatmul.mubr.bf16.gmra.mrb[0].mxu0 %v221
    %v356 = vpop.f32.mrb[0].mxu0
    %v357 = vadd.f32 0.0, %v356
    %v358 = vpop.f32.mrb[0].mxu0
    %v359 = vpop.f32.mrb[0].mxu0
    %v360 = vadd.f32 0.0, %v359
    %v361 = vpop.f32.mrb[0].mxu0
    %362 = vmatprep.mubr.bf16.mxu0 0
    %363 = vmatmul.mubr.bf16.gmra.mrb[0].mxu0 %v222
    %v364 = vpop.f32.mrb[0].mxu0
    %v365 = vadd.f32 0.0, %v364
    %v366 = vpop.f32.mrb[0].mxu0
    %v367 = vpop.f32.mrb[0].mxu0
    %v368 = vadd.f32 0.0, %v367
    %v369 = vpop.f32.mrb[0].mxu0
    %370 = vmatprep.mubr.bf16.mxu0 0
    %371 = vmatmul.mubr.bf16.gmra.mrb[0].mxu0 %v223
    %v372 = vpop.f32.mrb[0].mxu0
    %v373 = vadd.f32 0.0, %v372
    %v374 = vpop.f32.mrb[0].mxu0
    %v375 = vpop.f32.mrb[0].mxu0
    %v376 = vadd.f32 0.0, %v375
    %v377 = vpop.f32.mrb[0].mxu0
    %378 = vmatprep.mubr.bf16.mxu0 0
    %379 = vmatmul.mubr.bf16.gmra.mrb[0].mxu0 %v224
    %v380 = vpop.f32.mrb[0].mxu0
    %v381 = vadd.f32 0.0, %v380
    %v382 = vpop.f32.mrb[0].mxu0
    %v383 = vpop.f32.mrb[0].mxu0
    %v384 = vadd.f32 0.0, %v383
    %v385 = vpop.f32.mrb[0].mxu0
    %386 = vmatprep.mubr.bf16.mxu0 0
    %387 = vmatmul.mubr.bf16.gmra.mrb[0].mxu0 %v225
    %v388 = vpop.f32.mrb[0].mxu0
    %v389 = vadd.f32 0.0, %v388
    %v390 = vpop.f32.mrb[0].mxu0
    %v391 = vpop.f32.mrb[0].mxu0
    %v392 = vadd.f32 0.0, %v391
    %v393 = vpop.f32.mrb[0].mxu0
    %394 = vmatprep.mubr.bf16.mxu0 0
    %395 = vmatmul.mubr.bf16.gmra.mrb[0].mxu0 %v226
    %v396 = vpop.f32.mrb[0].mxu0
    %v397 = vadd.f32 0.0, %v396
    %v398 = vpop.f32.mrb[0].mxu0
    %v399 = vpop.f32.mrb[0].mxu0
    %v400 = vadd.f32 0.0, %v399
    %v401 = vpop.f32.mrb[0].mxu0
    %402 = vmatprep.mubr.bf16.mxu0 0
    %403 = vmatmul.mubr.bf16.gmra.mrb[0].mxu0 %v227
    %v404 = vpop.f32.mrb[0].mxu0
    %v405 = vadd.f32 0.0, %v404
    %v406 = vpop.f32.mrb[0].mxu0
    %v407 = vpop.f32.mrb[0].mxu0
    %v408 = vadd.f32 0.0, %v407
    %v409 = vpop.f32.mrb[0].mxu0
    %410 = vmatprep.mubr.bf16.mxu0 0
    %411 = vmatmul.mubr.bf16.gmra.mrb[0].mxu0 %v228
    %v412 = vpop.f32.mrb[0].mxu0
    %v413 = vadd.f32 0.0, %v412
    %v414 = vpop.f32.mrb[0].mxu0
    %v415 = vpop.f32.mrb[0].mxu0
    %v416 = vadd.f32 0.0, %v415
    %v417 = vpop.f32.mrb[0].mxu0
    %418 = vmatprep.mubr.bf16.mxu0 0
    %419 = vmatmul.mubr.bf16.gmra.mrb[0].mxu0 %v229
    %v420 = vpop.f32.mrb[0].mxu0
    %v421 = vadd.f32 0.0, %v420
    %v422 = vpop.f32.mrb[0].mxu0
    %v423 = vpop.f32.mrb[0].mxu0
    %v424 = vadd.f32 0.0, %v423
    %v425 = vpop.f32.mrb[0].mxu0
    %426 = vmatprep.mubr.bf16.mxu0 0
    %427 = vmatmul.mubr.bf16.gmra.mrb[0].mxu0 %v230
    %v428 = vpop.f32.mrb[0].mxu0
    %v429 = vadd.f32 0.0, %v428
    %v430 = vpop.f32.mrb[0].mxu0
    %v431 = vpop.f32.mrb[0].mxu0
    %v432 = vadd.f32 0.0, %v431
    %v433 = vpop.f32.mrb[0].mxu0
    %434 = vmatprep.mubr.bf16.mxu0 0
    %435 = vmatmul.mubr.bf16.gmra.mrb[0].mxu0 %v231
    %v436 = vpop.f32.mrb[0].mxu0
    %v437 = vadd.f32 0.0, %v436
    %v438 = vpop.f32.mrb[0].mxu0
    %v439 = vpop.f32.mrb[0].mxu0
    %v440 = vadd.f32 0.0, %v439
    %v441 = vpop.f32.mrb[0].mxu0
    %442 = vmatprep.mubr.bf16.mxu0 0
    %443 = vmatmul.mubr.bf16.gmra.mrb[0].mxu0 %v232
    %v444 = vpop.f32.mrb[0].mxu0
    %v445 = vadd.f32 0.0, %v444
    %v446 = vpop.f32.mrb[0].mxu0
    %v447 = vpop.f32.mrb[0].mxu0
    %v448 = vadd.f32 0.0, %v447
    %v449 = vpop.f32.mrb[0].mxu0
    %450 = vmatprep.mubr.bf16.mxu0 0
    %451 = vmatmul.mubr.bf16.gmra.mrb[0].mxu0 %v233
    %v452 = vpop.f32.mrb[0].mxu0
    %v453 = vadd.f32 0.0, %v452
    %v454 = vpop.f32.mrb[0].mxu0
    %v455 = vpop.f32.mrb[0].mxu0
    %v456 = vadd.f32 0.0, %v455
    %v457 = vpop.f32.mrb[0].mxu0
    %458 = vdwg.mxu0
    %v459 = vpack.c.bf16 %v336, %v333
    %v460 = vpack.c.bf16 %v344, %v341
    %v461 = vpack.c.bf16 %v352, %v349
    %v462 = vpack.c.bf16 %v360, %v357
    %v463 = vpack.c.bf16 %v368, %v365
    %v464 = vpack.c.bf16 %v376, %v373
    %v465 = vpack.c.bf16 %v384, %v381
    %v466 = vpack.c.bf16 %v392, %v389
    %v467 = vpack.c.bf16 %v400, %v397
    %v468 = vpack.c.bf16 %v408, %v405
    %v469 = vpack.c.bf16 %v416, %v413
    %v470 = vpack.c.bf16 %v424, %v421
    %v471 = vpack.c.bf16 %v432, %v429
    %v472 = vpack.c.bf16 %v440, %v437
    %v473 = vpack.c.bf16 %v448, %v445
    %v474 = vpack.c.bf16 %v456, %v453
    %v507 = vunpack.c.l.b16 %v122
    %v508 = vunpack.c.h.b16 %v122
    %v509 = vunpack.c.l.b16 %v123
    %v510 = vunpack.c.h.b16 %v123
    %v511 = vunpack.c.l.b16 %v124
    %v512 = vunpack.c.h.b16 %v124
    %v513 = vunpack.c.l.b16 %v125
    %v514 = vunpack.c.h.b16 %v125
    %v515 = vunpack.c.l.b16 %v126
    %v516 = vunpack.c.h.b16 %v126
    %v517 = vunpack.c.l.b16 %v127
    %v518 = vunpack.c.h.b16 %v127
    %v519 = vunpack.c.l.b16 %v128
    %v520 = vunpack.c.h.b16 %v128
    %v521 = vunpack.c.l.b16 %v129
    %v522 = vunpack.c.h.b16 %v129
    %v523 = vunpack.c.l.b16 %v130
    %v524 = vunpack.c.h.b16 %v130
    %v525 = vunpack.c.l.b16 %v131
    %v526 = vunpack.c.h.b16 %v131
    %v527 = vunpack.c.l.b16 %v132
    %v528 = vunpack.c.h.b16 %v132
    %v529 = vunpack.c.l.b16 %v133
    %v530 = vunpack.c.h.b16 %v133
    %v531 = vunpack.c.l.b16 %v134
    %v532 = vunpack.c.h.b16 %v134
    %v533 = vunpack.c.l.b16 %v135
    %v534 = vunpack.c.h.b16 %v135
    %v535 = vunpack.c.l.b16 %v136
    %v536 = vunpack.c.h.b16 %v136
    %v537 = vunpack.c.l.b16 %v137
    %v538 = vunpack.c.h.b16 %v137
    %v539 = vunpack.c.l.b16 %v138
    %v540 = vunpack.c.h.b16 %v138
    %v541 = vunpack.c.l.b16 %v139
    %v542 = vunpack.c.h.b16 %v139
    %v543 = vunpack.c.l.b16 %v140
    %v544 = vunpack.c.h.b16 %v140
    %v545 = vunpack.c.l.b16 %v141
    %v546 = vunpack.c.h.b16 %v141
    %v547 = vunpack.c.l.b16 %v142
    %v548 = vunpack.c.h.b16 %v142
    %v549 = vunpack.c.l.b16 %v143
    %v550 = vunpack.c.h.b16 %v143
    %v551 = vunpack.c.l.b16 %v144
    %v552 = vunpack.c.h.b16 %v144
    %v553 = vunpack.c.l.b16 %v145
    %v554 = vunpack.c.h.b16 %v145
    %v555 = vunpack.c.l.b16 %v146
    %v556 = vunpack.c.h.b16 %v146
    %v557 = vunpack.c.l.b16 %v147
    %v558 = vunpack.c.h.b16 %v147
    %v559 = vunpack.c.l.b16 %v148
    %v560 = vunpack.c.h.b16 %v148
    %v561 = vunpack.c.l.b16 %v149
    %v562 = vunpack.c.h.b16 %v149
    %v563 = vunpack.c.l.b16 %v150
    %v564 = vunpack.c.h.b16 %v150
    %v565 = vunpack.c.l.b16 %v151
    %v566 = vunpack.c.h.b16 %v151
    %v567 = vunpack.c.l.b16 %v152
    %v568 = vunpack.c.h.b16 %v152
    %v569 = vunpack.c.l.b16 %v153
    %v570 = vunpack.c.h.b16 %v153
    %v571 = vpack.c.b16 %v509, %v507
    %v572 = vpack.c.b16 %v510, %v508
    %v573 = vpack.c.b16 %v513, %v511
    %v574 = vpack.c.b16 %v514, %v512
    %v575 = vpack.c.b16 %v517, %v515
    %v576 = vpack.c.b16 %v518, %v516
    %v577 = vpack.c.b16 %v521, %v519
    %v578 = vpack.c.b16 %v522, %v520
    %v579 = vpack.c.b16 %v525, %v523
    %v580 = vpack.c.b16 %v526, %v524
    %v581 = vpack.c.b16 %v529, %v527
    %v582 = vpack.c.b16 %v530, %v528
    %v583 = vpack.c.b16 %v533, %v531
    %v584 = vpack.c.b16 %v534, %v532
    %v585 = vpack.c.b16 %v537, %v535
    %v586 = vpack.c.b16 %v538, %v536
    %v587 = vpack.c.b16 %v541, %v539
    %v588 = vpack.c.b16 %v542, %v540
    %v589 = vpack.c.b16 %v545, %v543
    %v590 = vpack.c.b16 %v546, %v544
    %v591 = vpack.c.b16 %v549, %v547
    %v592 = vpack.c.b16 %v550, %v548
    %v593 = vpack.c.b16 %v553, %v551
    %v594 = vpack.c.b16 %v554, %v552
    %v595 = vpack.c.b16 %v557, %v555
    %v596 = vpack.c.b16 %v558, %v556
    %v597 = vpack.c.b16 %v561, %v559
    %v598 = vpack.c.b16 %v562, %v560
    %v599 = vpack.c.b16 %v565, %v563
    %v600 = vpack.c.b16 %v566, %v564
    %v601 = vpack.c.b16 %v569, %v567
    %v602 = vpack.c.b16 %v570, %v568
    %635 = vmatprep.subr.bf16.mxu0 0
    %636 = vmatpush1.bf16.msra.mxu0 %v459
    %637 = vmatprep.subr.bf16.mxu0 0
    %638 = vmatpush1.bf16.msra.mxu0 %v460
    %639 = vmatprep.subr.bf16.mxu0 0
    %640 = vmatpush1.bf16.msra.mxu0 %v461
    %641 = vmatprep.subr.bf16.mxu0 0
    %642 = vmatpush1.bf16.msra.mxu0 %v462
    %643 = vmatprep.subr.bf16.mxu0 0
    %644 = vmatpush1.bf16.msra.mxu0 %v463
    %645 = vmatprep.subr.bf16.mxu0 0
    %646 = vmatpush1.bf16.msra.mxu0 %v464
    %647 = vmatprep.subr.bf16.mxu0 0
    %648 = vmatpush1.bf16.msra.mxu0 %v465
    %649 = vmatprep.subr.bf16.mxu0 0
    %650 = vmatpush1.bf16.msra.mxu0 %v466
    %651 = vmatprep.subr.bf16.mxu0 0
    %652 = vmatpush1.bf16.msra.mxu0 %v467
    %653 = vmatprep.subr.bf16.mxu0 0
    %654 = vmatpush1.bf16.msra.mxu0 %v468
    %655 = vmatprep.subr.bf16.mxu0 0
    %656 = vmatpush1.bf16.msra.mxu0 %v469
    %657 = vmatprep.subr.bf16.mxu0 0
    %658 = vmatpush1.bf16.msra.mxu0 %v470
    %659 = vmatprep.subr.bf16.mxu0 0
    %660 = vmatpush1.bf16.msra.mxu0 %v471
    %661 = vmatprep.subr.bf16.mxu0 0
    %662 = vmatpush1.bf16.msra.mxu0 %v472
    %663 = vmatprep.subr.bf16.mxu0 0
    %664 = vmatpush1.bf16.msra.mxu0 %v473
    %665 = vmatprep.subr.bf16.mxu0 0
    %666 = vmatpush1.bf16.msra.mxu0 %v474
    %667 = vmatprep.mubr.bf16.mxu0 %v572
    %668 = vmatmul.mubr.bf16.gmra.mrb[0].mxu0 %v571
    %v669 = vpop.f32.mrb[0].mxu0
    %v670 = vadd.f32 0.0, %v669
    %v671 = vpop.f32.mrb[0].mxu0
    %v672 = vpop.f32.mrb[0].mxu0
    %v673 = vadd.f32 0.0, %v672
    %v674 = vpop.f32.mrb[0].mxu0
    %675 = vmatprep.mubr.bf16.mxu0 %v574
    %676 = vmatmul.mubr.bf16.gmra.mrb[0].mxu0 %v573
    %v677 = vpop.f32.mrb[0].mxu0
    %v678 = vadd.f32 0.0, %v677
    %v679 = vpop.f32.mrb[0].mxu0
    %v680 = vpop.f32.mrb[0].mxu0
    %v681 = vadd.f32 0.0, %v680
    %v682 = vpop.f32.mrb[0].mxu0
    %683 = vmatprep.mubr.bf16.mxu0 %v576
    %684 = vmatmul.mubr.bf16.gmra.mrb[0].mxu0 %v575
    %v685 = vpop.f32.mrb[0].mxu0
    %v686 = vadd.f32 0.0, %v685
    %v687 = vpop.f32.mrb[0].mxu0
    %v688 = vpop.f32.mrb[0].mxu0
    %v689 = vadd.f32 0.0, %v688
    %v690 = vpop.f32.mrb[0].mxu0
    %691 = vmatprep.mubr.bf16.mxu0 %v578
    %692 = vmatmul.mubr.bf16.gmra.mrb[0].mxu0 %v577
    %v693 = vpop.f32.mrb[0].mxu0
    %v694 = vadd.f32 0.0, %v693
    %v695 = vpop.f32.mrb[0].mxu0
    %v696 = vpop.f32.mrb[0].mxu0
    %v697 = vadd.f32 0.0, %v696
    %v698 = vpop.f32.mrb[0].mxu0
    %699 = vmatprep.mubr.bf16.mxu0 %v580
    %700 = vmatmul.mubr.bf16.gmra.mrb[0].mxu0 %v579
    %v701 = vpop.f32.mrb[0].mxu0
    %v702 = vadd.f32 0.0, %v701
    %v703 = vpop.f32.mrb[0].mxu0
    %v704 = vpop.f32.mrb[0].mxu0
    %v705 = vadd.f32 0.0, %v704
    %v706 = vpop.f32.mrb[0].mxu0
    %707 = vmatprep.mubr.bf16.mxu0 %v582
    %708 = vmatmul.mubr.bf16.gmra.mrb[0].mxu0 %v581
    %v709 = vpop.f32.mrb[0].mxu0
    %v710 = vadd.f32 0.0, %v709
    %v711 = vpop.f32.mrb[0].mxu0
    %v712 = vpop.f32.mrb[0].mxu0
    %v713 = vadd.f32 0.0, %v712
    %v714 = vpop.f32.mrb[0].mxu0
    %715 = vmatprep.mubr.bf16.mxu0 %v584
    %716 = vmatmul.mubr.bf16.gmra.mrb[0].mxu0 %v583
    %v717 = vpop.f32.mrb[0].mxu0
    %v718 = vadd.f32 0.0, %v717
    %v719 = vpop.f32.mrb[0].mxu0
    %v720 = vpop.f32.mrb[0].mxu0
    %v721 = vadd.f32 0.0, %v720
    %v722 = vpop.f32.mrb[0].mxu0
    %723 = vmatprep.mubr.bf16.mxu0 %v586
    %724 = vmatmul.mubr.bf16.gmra.mrb[0].mxu0 %v585
    %v725 = vpop.f32.mrb[0].mxu0
    %v726 = vadd.f32 0.0, %v725
    %v727 = vpop.f32.mrb[0].mxu0
    %v728 = vpop.f32.mrb[0].mxu0
    %v729 = vadd.f32 0.0, %v728
    %v730 = vpop.f32.mrb[0].mxu0
    %731 = vmatprep.mubr.bf16.mxu0 %v588
    %732 = vmatmul.mubr.bf16.gmra.mrb[0].mxu0 %v587
    %v733 = vpop.f32.mrb[0].mxu0
    %v734 = vadd.f32 0.0, %v733
    %v735 = vpop.f32.mrb[0].mxu0
    %v736 = vpop.f32.mrb[0].mxu0
    %v737 = vadd.f32 0.0, %v736
    %v738 = vpop.f32.mrb[0].mxu0
    %739 = vmatprep.mubr.bf16.mxu0 %v590
    %740 = vmatmul.mubr.bf16.gmra.mrb[0].mxu0 %v589
    %v741 = vpop.f32.mrb[0].mxu0
    %v742 = vadd.f32 0.0, %v741
    %v743 = vpop.f32.mrb[0].mxu0
    %v744 = vpop.f32.mrb[0].mxu0
    %v745 = vadd.f32 0.0, %v744
    %v746 = vpop.f32.mrb[0].mxu0
    %747 = vmatprep.mubr.bf16.mxu0 %v592
    %748 = vmatmul.mubr.bf16.gmra.mrb[0].mxu0 %v591
    %v749 = vpop.f32.mrb[0].mxu0
    %v750 = vadd.f32 0.0, %v749
    %v751 = vpop.f32.mrb[0].mxu0
    %v752 = vpop.f32.mrb[0].mxu0
    %v753 = vadd.f32 0.0, %v752
    %v754 = vpop.f32.mrb[0].mxu0
    %755 = vmatprep.mubr.bf16.mxu0 %v594
    %756 = vmatmul.mubr.bf16.gmra.mrb[0].mxu0 %v593
    %v757 = vpop.f32.mrb[0].mxu0
    %v758 = vadd.f32 0.0, %v757
    %v759 = vpop.f32.mrb[0].mxu0
    %v760 = vpop.f32.mrb[0].mxu0
    %v761 = vadd.f32 0.0, %v760
    %v762 = vpop.f32.mrb[0].mxu0
    %763 = vmatprep.mubr.bf16.mxu0 %v596
    %764 = vmatmul.mubr.bf16.gmra.mrb[0].mxu0 %v595
    %v765 = vpop.f32.mrb[0].mxu0
    %v766 = vadd.f32 0.0, %v765
    %v767 = vpop.f32.mrb[0].mxu0
    %v768 = vpop.f32.mrb[0].mxu0
    %v769 = vadd.f32 0.0, %v768
    %v770 = vpop.f32.mrb[0].mxu0
    %771 = vmatprep.mubr.bf16.mxu0 %v598
    %772 = vmatmul.mubr.bf16.gmra.mrb[0].mxu0 %v597
    %v773 = vpop.f32.mrb[0].mxu0
    %v774 = vadd.f32 0.0, %v773
    %v775 = vpop.f32.mrb[0].mxu0
    %v776 = vpop.f32.mrb[0].mxu0
    %v777 = vadd.f32 0.0, %v776
    %v778 = vpop.f32.mrb[0].mxu0
    %779 = vmatprep.mubr.bf16.mxu0 %v600
    %780 = vmatmul.mubr.bf16.gmra.mrb[0].mxu0 %v599
    %v781 = vpop.f32.mrb[0].mxu0
    %v782 = vadd.f32 0.0, %v781
    %v783 = vpop.f32.mrb[0].mxu0
    %v784 = vpop.f32.mrb[0].mxu0
    %v785 = vadd.f32 0.0, %v784
    %v786 = vpop.f32.mrb[0].mxu0
    %787 = vmatprep.mubr.bf16.mxu0 %v602
    %788 = vmatmul.mubr.bf16.gmra.mrb[0].mxu0 %v601
    %v789 = vpop.f32.mrb[0].mxu0
    %v790 = vadd.f32 0.0, %v789
    %v791 = vpop.f32.mrb[0].mxu0
    %v792 = vpop.f32.mrb[0].mxu0
    %v793 = vadd.f32 0.0, %v792
    %v794 = vpop.f32.mrb[0].mxu0
    %795 = vdwg.mxu0
    %v796 = vmax.f32 %v670, 0.0
    %v797 = vmax.f32 %v673, 0.0
    %v798 = vmax.f32 %v678, 0.0
    %v799 = vmax.f32 %v681, 0.0
    %v800 = vmax.f32 %v686, 0.0
    %v801 = vmax.f32 %v689, 0.0
    %v802 = vmax.f32 %v694, 0.0
    %v803 = vmax.f32 %v697, 0.0
    %v804 = vmax.f32 %v702, 0.0
    %v805 = vmax.f32 %v705, 0.0
    %v806 = vmax.f32 %v710, 0.0
    %v807 = vmax.f32 %v713, 0.0
    %v808 = vmax.f32 %v718, 0.0
    %v809 = vmax.f32 %v721, 0.0
    %v810 = vmax.f32 %v726, 0.0
    %v811 = vmax.f32 %v729, 0.0
    %v812 = vmax.f32 %v734, 0.0
    %v813 = vmax.f32 %v737, 0.0
    %v814 = vmax.f32 %v742, 0.0
    %v815 = vmax.f32 %v745, 0.0
    %v816 = vmax.f32 %v750, 0.0
    %v817 = vmax.f32 %v753, 0.0
    %v818 = vmax.f32 %v758, 0.0
    %v819 = vmax.f32 %v761, 0.0
    %v820 = vmax.f32 %v766, 0.0
    %v821 = vmax.f32 %v769, 0.0
    %v822 = vmax.f32 %v774, 0.0
    %v823 = vmax.f32 %v777, 0.0
    %v824 = vmax.f32 %v782, 0.0
    %v825 = vmax.f32 %v785, 0.0
    %v826 = vmax.f32 %v790, 0.0
    %v827 = vmax.f32 %v793, 0.0
    %v828 = vpack.c.bf16 %v797, %v796
    %v829 = vpack.c.bf16 %v799, %v798
    %v830 = vpack.c.bf16 %v801, %v800
    %v831 = vpack.c.bf16 %v803, %v802
    %v832 = vpack.c.bf16 %v805, %v804
    %v833 = vpack.c.bf16 %v807, %v806
    %v834 = vpack.c.bf16 %v809, %v808
    %v835 = vpack.c.bf16 %v811, %v810
    %v836 = vpack.c.bf16 %v813, %v812
    %v837 = vpack.c.bf16 %v815, %v814
    %v838 = vpack.c.bf16 %v817, %v816
    %v839 = vpack.c.bf16 %v819, %v818
    %v840 = vpack.c.bf16 %v821, %v820
    %v841 = vpack.c.bf16 %v823, %v822
    %v842 = vpack.c.bf16 %v825, %v824
    %v843 = vpack.c.bf16 %v827, %v826
    %v844 = vld [vmem:[#allocation10] sm:$0xf]
    %v845 = vld [vmem:[#allocation10 + $0x4] sm:$0xf]
    %v846 = vld [vmem:[#allocation10 + $0x8] sm:$0xf]
    %v847 = vld [vmem:[#allocation10 + $0xc] sm:$0xf]
    %v848 = vld [vmem:[#allocation10 + $0x10] sm:$0xf]
    %v849 = vld [vmem:[#allocation10 + $0x14] sm:$0xf]
    %v850 = vld [vmem:[#allocation10 + $0x18] sm:$0xf]
    %v851 = vld [vmem:[#allocation10 + $0x1c] sm:$0xf]
    %v852 = vld [vmem:[#allocation10 + $0x20] sm:$0xf]
    %v853 = vld [vmem:[#allocation10 + $0x24] sm:$0xf]
    %v854 = vld [vmem:[#allocation10 + $0x28] sm:$0xf]
    %v855 = vld [vmem:[#allocation10 + $0x2c] sm:$0xf]
    %v856 = vld [vmem:[#allocation10 + $0x30] sm:$0xf]
    %v857 = vld [vmem:[#allocation10 + $0x34] sm:$0xf]
    %v858 = vld [vmem:[#allocation10 + $0x38] sm:$0xf]
    %v859 = vld [vmem:[#allocation10 + $0x3c] sm:$0xf]
    %v876 = vunpack.c.l.b16 %v844
    %v877 = vunpack.c.l.b16 %v845
    %v878 = vunpack.c.l.b16 %v846
    %v879 = vunpack.c.l.b16 %v847
    %v880 = vunpack.c.l.b16 %v848
    %v881 = vunpack.c.l.b16 %v849
    %v882 = vunpack.c.l.b16 %v850
    %v883 = vunpack.c.l.b16 %v851
    %v884 = vunpack.c.l.b16 %v852
    %v885 = vunpack.c.l.b16 %v853
    %v886 = vunpack.c.l.b16 %v854
    %v887 = vunpack.c.l.b16 %v855
    %v888 = vunpack.c.l.b16 %v856
    %v889 = vunpack.c.l.b16 %v857
    %v890 = vunpack.c.l.b16 %v858
    %v891 = vunpack.c.l.b16 %v859
    %v892 = vpack.c.b16 %v877, %v876
    %v893 = vpack.c.b16 %v879, %v878
    %v894 = vpack.c.b16 %v881, %v880
    %v895 = vpack.c.b16 %v883, %v882
    %v896 = vpack.c.b16 %v885, %v884
    %v897 = vpack.c.b16 %v887, %v886
    %v898 = vpack.c.b16 %v889, %v888
    %v899 = vpack.c.b16 %v891, %v890
    %908 = vmatprep.subr.bf16.mxu0 0
    %909 = vmatpush1.bf16.msra.mxu0 %v892
    %910 = vmatprep.subr.bf16.mxu0 0
    %911 = vmatpush1.bf16.msra.mxu0 %v893
    %912 = vmatprep.subr.bf16.mxu0 0
    %913 = vmatpush1.bf16.msra.mxu0 %v894
    %914 = vmatprep.subr.bf16.mxu0 0
    %915 = vmatpush1.bf16.msra.mxu0 %v895
    %916 = vmatprep.subr.bf16.mxu0 0
    %917 = vmatpush1.bf16.msra.mxu0 %v896
    %918 = vmatprep.subr.bf16.mxu0 0
    %919 = vmatpush1.bf16.msra.mxu0 %v897
    %920 = vmatprep.subr.bf16.mxu0 0
    %921 = vmatpush1.bf16.msra.mxu0 %v898
    %922 = vmatprep.subr.bf16.mxu0 0
    %923 = vmatpush1.bf16.msra.mxu0 %v899
    %924 = vmatprep.subr.bf16.mxu0 0
    %925 = vmatpush1.bf16.msra.mxu0 0
    %926 = vmatprep.subr.bf16.mxu0 0
    %927 = vmatpush1.bf16.msra.mxu0 0
    %928 = vmatprep.subr.bf16.mxu0 0
    %929 = vmatpush1.bf16.msra.mxu0 0
    %930 = vmatprep.subr.bf16.mxu0 0
    %931 = vmatpush1.bf16.msra.mxu0 0
    %932 = vmatprep.subr.bf16.mxu0 0
    %933 = vmatpush1.bf16.msra.mxu0 0
    %934 = vmatprep.subr.bf16.mxu0 0
    %935 = vmatpush1.bf16.msra.mxu0 0
    %936 = vmatprep.subr.bf16.mxu0 0
    %937 = vmatpush1.bf16.msra.mxu0 0
    %938 = vmatprep.subr.bf16.mxu0 0
    %939 = vmatpush1.bf16.msra.mxu0 0
    %940 = vmatprep.mubr.bf16.mxu0 0
    %941 = vmatmul.mubr.bf16.gmra.mrb[0].mxu0 %v828
    %v942 = vpop.f32.mrb[0].mxu0
    %v943 = vadd.f32 0.0, %v942
    %v944 = vpop.f32.mrb[0].mxu0
    %v945 = vpop.f32.mrb[0].mxu0
    %v946 = vadd.f32 0.0, %v945
    %v947 = vpop.f32.mrb[0].mxu0
    %948 = vmatprep.mubr.bf16.mxu0 0
    %949 = vmatmul.mubr.bf16.gmra.mrb[0].mxu0 %v829
    %v950 = vpop.f32.mrb[0].mxu0
    %v951 = vadd.f32 0.0, %v950
    %v952 = vpop.f32.mrb[0].mxu0
    %v953 = vpop.f32.mrb[0].mxu0
    %v954 = vadd.f32 0.0, %v953
    %v955 = vpop.f32.mrb[0].mxu0
    %956 = vmatprep.mubr.bf16.mxu0 0
    %957 = vmatmul.mubr.bf16.gmra.mrb[0].mxu0 %v830
    %v958 = vpop.f32.mrb[0].mxu0
    %v959 = vadd.f32 0.0, %v958
    %v960 = vpop.f32.mrb[0].mxu0
    %v961 = vpop.f32.mrb[0].mxu0
    %v962 = vadd.f32 0.0, %v961
    %v963 = vpop.f32.mrb[0].mxu0
    %964 = vmatprep.mubr.bf16.mxu0 0
    %965 = vmatmul.mubr.bf16.gmra.mrb[0].mxu0 %v831
    %v966 = vpop.f32.mrb[0].mxu0
    %v967 = vadd.f32 0.0, %v966
    %v968 = vpop.f32.mrb[0].mxu0
    %v969 = vpop.f32.mrb[0].mxu0
    %v970 = vadd.f32 0.0, %v969
    %v971 = vpop.f32.mrb[0].mxu0
    %972 = vmatprep.mubr.bf16.mxu0 0
    %973 = vmatmul.mubr.bf16.gmra.mrb[0].mxu0 %v832
    %v974 = vpop.f32.mrb[0].mxu0
    %v975 = vadd.f32 0.0, %v974
    %v976 = vpop.f32.mrb[0].mxu0
    %v977 = vpop.f32.mrb[0].mxu0
    %v978 = vadd.f32 0.0, %v977
    %v979 = vpop.f32.mrb[0].mxu0
    %980 = vmatprep.mubr.bf16.mxu0 0
    %981 = vmatmul.mubr.bf16.gmra.mrb[0].mxu0 %v833
    %v982 = vpop.f32.mrb[0].mxu0
    %v983 = vadd.f32 0.0, %v982
    %v984 = vpop.f32.mrb[0].mxu0
    %v985 = vpop.f32.mrb[0].mxu0
    %v986 = vadd.f32 0.0, %v985
    %v987 = vpop.f32.mrb[0].mxu0
    %988 = vmatprep.mubr.bf16.mxu0 0
    %989 = vmatmul.mubr.bf16.gmra.mrb[0].mxu0 %v834
    %v990 = vpop.f32.mrb[0].mxu0
    %v991 = vadd.f32 0.0, %v990
    %v992 = vpop.f32.mrb[0].mxu0
    %v993 = vpop.f32.mrb[0].mxu0
    %v994 = vadd.f32 0.0, %v993
    %v995 = vpop.f32.mrb[0].mxu0
    %996 = vmatprep.mubr.bf16.mxu0 0
    %997 = vmatmul.mubr.bf16.gmra.mrb[0].mxu0 %v835
    %v998 = vpop.f32.mrb[0].mxu0
    %v999 = vadd.f32 0.0, %v998
    %v1000 = vpop.f32.mrb[0].mxu0
    %v1001 = vpop.f32.mrb[0].mxu0
    %v1002 = vadd.f32 0.0, %v1001
    %v1003 = vpop.f32.mrb[0].mxu0
    %1004 = vmatprep.mubr.bf16.mxu0 0
    %1005 = vmatmul.mubr.bf16.gmra.mrb[0].mxu0 %v836
    %v1006 = vpop.f32.mrb[0].mxu0
    %v1007 = vadd.f32 0.0, %v1006
    %v1008 = vpop.f32.mrb[0].mxu0
    %v1009 = vpop.f32.mrb[0].mxu0
    %v1010 = vadd.f32 0.0, %v1009
    %v1011 = vpop.f32.mrb[0].mxu0
    %1012 = vmatprep.mubr.bf16.mxu0 0
    %1013 = vmatmul.mubr.bf16.gmra.mrb[0].mxu0 %v837
    %v1014 = vpop.f32.mrb[0].mxu0
    %v1015 = vadd.f32 0.0, %v1014
    %v1016 = vpop.f32.mrb[0].mxu0
    %v1017 = vpop.f32.mrb[0].mxu0
    %v1018 = vadd.f32 0.0, %v1017
    %v1019 = vpop.f32.mrb[0].mxu0
    %1020 = vmatprep.mubr.bf16.mxu0 0
    %1021 = vmatmul.mubr.bf16.gmra.mrb[0].mxu0 %v838
    %v1022 = vpop.f32.mrb[0].mxu0
    %v1023 = vadd.f32 0.0, %v1022
    %v1024 = vpop.f32.mrb[0].mxu0
    %v1025 = vpop.f32.mrb[0].mxu0
    %v1026 = vadd.f32 0.0, %v1025
    %v1027 = vpop.f32.mrb[0].mxu0
    %1028 = vmatprep.mubr.bf16.mxu0 0
    %1029 = vmatmul.mubr.bf16.gmra.mrb[0].mxu0 %v839
    %v1030 = vpop.f32.mrb[0].mxu0
    %v1031 = vadd.f32 0.0, %v1030
    %v1032 = vpop.f32.mrb[0].mxu0
    %v1033 = vpop.f32.mrb[0].mxu0
    %v1034 = vadd.f32 0.0, %v1033
    %v1035 = vpop.f32.mrb[0].mxu0
    %1036 = vmatprep.mubr.bf16.mxu0 0
    %1037 = vmatmul.mubr.bf16.gmra.mrb[0].mxu0 %v840
    %v1038 = vpop.f32.mrb[0].mxu0
    %v1039 = vadd.f32 0.0, %v1038
    %v1040 = vpop.f32.mrb[0].mxu0
    %v1041 = vpop.f32.mrb[0].mxu0
    %v1042 = vadd.f32 0.0, %v1041
    %v1043 = vpop.f32.mrb[0].mxu0
    %1044 = vmatprep.mubr.bf16.mxu0 0
    %1045 = vmatmul.mubr.bf16.gmra.mrb[0].mxu0 %v841
    %v1046 = vpop.f32.mrb[0].mxu0
    %v1047 = vadd.f32 0.0, %v1046
    %v1048 = vpop.f32.mrb[0].mxu0
    %v1049 = vpop.f32.mrb[0].mxu0
    %v1050 = vadd.f32 0.0, %v1049
    %v1051 = vpop.f32.mrb[0].mxu0
    %1052 = vmatprep.mubr.bf16.mxu0 0
    %1053 = vmatmul.mubr.bf16.gmra.mrb[0].mxu0 %v842
    %v1054 = vpop.f32.mrb[0].mxu0
    %v1055 = vadd.f32 0.0, %v1054
    %v1056 = vpop.f32.mrb[0].mxu0
    %v1057 = vpop.f32.mrb[0].mxu0
    %v1058 = vadd.f32 0.0, %v1057
    %v1059 = vpop.f32.mrb[0].mxu0
    %1060 = vmatprep.mubr.bf16.mxu0 0
    %1061 = vmatmul.mubr.bf16.gmra.mrb[0].mxu0 %v843
    %v1062 = vpop.f32.mrb[0].mxu0
    %v1063 = vadd.f32 0.0, %v1062
    %v1064 = vpop.f32.mrb[0].mxu0
    %v1065 = vpop.f32.mrb[0].mxu0
    %v1066 = vadd.f32 0.0, %v1065
    %v1067 = vpop.f32.mrb[0].mxu0
    %1068 = vdwg.mxu0
    %v1069 = vpack.c.bf16 %v946, %v943
    %v1070 = vpack.c.bf16 %v954, %v951
    %v1071 = vpack.c.bf16 %v962, %v959
    %v1072 = vpack.c.bf16 %v970, %v967
    %v1073 = vpack.c.bf16 %v978, %v975
    %v1074 = vpack.c.bf16 %v986, %v983
    %v1075 = vpack.c.bf16 %v994, %v991
    %v1076 = vpack.c.bf16 %v1002, %v999
    %v1077 = vpack.c.bf16 %v1010, %v1007
    %v1078 = vpack.c.bf16 %v1018, %v1015
    %v1079 = vpack.c.bf16 %v1026, %v1023
    %v1080 = vpack.c.bf16 %v1034, %v1031
    %v1081 = vpack.c.bf16 %v1042, %v1039
    %v1082 = vpack.c.bf16 %v1050, %v1047
    %v1083 = vpack.c.bf16 %v1058, %v1055
    %v1084 = vpack.c.bf16 %v1066, %v1063
    %1085 = vmatprep.subr.bf16.mxu0 0
    %1086 = vmatpush1.bf16.msra.mxu0 %v1069
    %1087 = vmatprep.subr.bf16.mxu0 0
    %1088 = vmatpush1.bf16.msra.mxu0 %v1070
    %1089 = vmatprep.subr.bf16.mxu0 0
    %1090 = vmatpush1.bf16.msra.mxu0 %v1071
    %1091 = vmatprep.subr.bf16.mxu0 0
    %1092 = vmatpush1.bf16.msra.mxu0 %v1072
    %1093 = vmatprep.subr.bf16.mxu0 0
    %1094 = vmatpush1.bf16.msra.mxu0 %v1073
    %1095 = vmatprep.subr.bf16.mxu0 0
    %1096 = vmatpush1.bf16.msra.mxu0 %v1074
    %1097 = vmatprep.subr.bf16.mxu0 0
    %1098 = vmatpush1.bf16.msra.mxu0 %v1075
    %1099 = vmatprep.subr.bf16.mxu0 0
    %1100 = vmatpush1.bf16.msra.mxu0 %v1076
    %1101 = vmatprep.subr.bf16.mxu0 0
    %1102 = vmatpush1.bf16.msra.mxu0 %v1077
    %1103 = vmatprep.subr.bf16.mxu0 0
    %1104 = vmatpush1.bf16.msra.mxu0 %v1078
    %1105 = vmatprep.subr.bf16.mxu0 0
    %1106 = vmatpush1.bf16.msra.mxu0 %v1079
    %1107 = vmatprep.subr.bf16.mxu0 0
    %1108 = vmatpush1.bf16.msra.mxu0 %v1080
    %1109 = vmatprep.subr.bf16.mxu0 0
    %1110 = vmatpush1.bf16.msra.mxu0 %v1081
    %1111 = vmatprep.subr.bf16.mxu0 0
    %1112 = vmatpush1.bf16.msra.mxu0 %v1082
    %1113 = vmatprep.subr.bf16.mxu0 0
    %1114 = vmatpush1.bf16.msra.mxu0 %v1083
    %1115 = vmatprep.subr.bf16.mxu0 0
    %1116 = vmatpush1.bf16.msra.mxu0 %v1084
    %1117 = vmatprep.mubr.bf16.mxu0 %v572
    %1118 = vmatmul.mubr.bf16.gmra.mrb[0].mxu0 %v571
    %v1119 = vpop.f32.mrb[0].mxu0
    %v1120 = vadd.f32 0.0, %v1119
    %v1121 = vpop.f32.mrb[0].mxu0
    %v1122 = vpop.f32.mrb[0].mxu0
    %v1123 = vadd.f32 0.0, %v1122
    %v1124 = vpop.f32.mrb[0].mxu0
    %1125 = vmatprep.mubr.bf16.mxu0 %v574
    %1126 = vmatmul.mubr.bf16.gmra.mrb[0].mxu0 %v573
    %v1127 = vpop.f32.mrb[0].mxu0
    %v1128 = vadd.f32 0.0, %v1127
    %v1129 = vpop.f32.mrb[0].mxu0
    %v1130 = vpop.f32.mrb[0].mxu0
    %v1131 = vadd.f32 0.0, %v1130
    %v1132 = vpop.f32.mrb[0].mxu0
    %1133 = vmatprep.mubr.bf16.mxu0 %v576
    %1134 = vmatmul.mubr.bf16.gmra.mrb[0].mxu0 %v575
    %v1135 = vpop.f32.mrb[0].mxu0
    %v1136 = vadd.f32 0.0, %v1135
    %v1137 = vpop.f32.mrb[0].mxu0
    %v1138 = vpop.f32.mrb[0].mxu0
    %v1139 = vadd.f32 0.0, %v1138
    %v1140 = vpop.f32.mrb[0].mxu0
    %1141 = vmatprep.mubr.bf16.mxu0 %v578
    %1142 = vmatmul.mubr.bf16.gmra.mrb[0].mxu0 %v577
    %v1143 = vpop.f32.mrb[0].mxu0
    %v1144 = vadd.f32 0.0, %v1143
    %v1145 = vpop.f32.mrb[0].mxu0
    %v1146 = vpop.f32.mrb[0].mxu0
    %v1147 = vadd.f32 0.0, %v1146
    %v1148 = vpop.f32.mrb[0].mxu0
    %1149 = vmatprep.mubr.bf16.mxu0 %v580
    %1150 = vmatmul.mubr.bf16.gmra.mrb[0].mxu0 %v579
    %v1151 = vpop.f32.mrb[0].mxu0
    %v1152 = vadd.f32 0.0, %v1151
    %v1153 = vpop.f32.mrb[0].mxu0
    %v1154 = vpop.f32.mrb[0].mxu0
    %v1155 = vadd.f32 0.0, %v1154
    %v1156 = vpop.f32.mrb[0].mxu0
    %1157 = vmatprep.mubr.bf16.mxu0 %v582
    %1158 = vmatmul.mubr.bf16.gmra.mrb[0].mxu0 %v581
    %v1159 = vpop.f32.mrb[0].mxu0
    %v1160 = vadd.f32 0.0, %v1159
    %v1161 = vpop.f32.mrb[0].mxu0
    %v1162 = vpop.f32.mrb[0].mxu0
    %v1163 = vadd.f32 0.0, %v1162
    %v1164 = vpop.f32.mrb[0].mxu0
    %1165 = vmatprep.mubr.bf16.mxu0 %v584
    %1166 = vmatmul.mubr.bf16.gmra.mrb[0].mxu0 %v583
    %v1167 = vpop.f32.mrb[0].mxu0
    %v1168 = vadd.f32 0.0, %v1167
    %v1169 = vpop.f32.mrb[0].mxu0
    %v1170 = vpop.f32.mrb[0].mxu0
    %v1171 = vadd.f32 0.0, %v1170
    %v1172 = vpop.f32.mrb[0].mxu0
    %1173 = vmatprep.mubr.bf16.mxu0 %v586
    %1174 = vmatmul.mubr.bf16.gmra.mrb[0].mxu0 %v585
    %v1175 = vpop.f32.mrb[0].mxu0
    %v1176 = vadd.f32 0.0, %v1175
    %v1177 = vpop.f32.mrb[0].mxu0
    %v1178 = vpop.f32.mrb[0].mxu0
    %v1179 = vadd.f32 0.0, %v1178
    %v1180 = vpop.f32.mrb[0].mxu0
    %1181 = vmatprep.mubr.bf16.mxu0 %v588
    %1182 = vmatmul.mubr.bf16.gmra.mrb[0].mxu0 %v587
    %v1183 = vpop.f32.mrb[0].mxu0
    %v1184 = vadd.f32 0.0, %v1183
    %v1185 = vpop.f32.mrb[0].mxu0
    %v1186 = vpop.f32.mrb[0].mxu0
    %v1187 = vadd.f32 0.0, %v1186
    %v1188 = vpop.f32.mrb[0].mxu0
    %1189 = vmatprep.mubr.bf16.mxu0 %v590
    %1190 = vmatmul.mubr.bf16.gmra.mrb[0].mxu0 %v589
    %v1191 = vpop.f32.mrb[0].mxu0
    %v1192 = vadd.f32 0.0, %v1191
    %v1193 = vpop.f32.mrb[0].mxu0
    %v1194 = vpop.f32.mrb[0].mxu0
    %v1195 = vadd.f32 0.0, %v1194
    %v1196 = vpop.f32.mrb[0].mxu0
    %1197 = vmatprep.mubr.bf16.mxu0 %v592
    %1198 = vmatmul.mubr.bf16.gmra.mrb[0].mxu0 %v591
    %v1199 = vpop.f32.mrb[0].mxu0
    %v1200 = vadd.f32 0.0, %v1199
    %v1201 = vpop.f32.mrb[0].mxu0
    %v1202 = vpop.f32.mrb[0].mxu0
    %v1203 = vadd.f32 0.0, %v1202
    %v1204 = vpop.f32.mrb[0].mxu0
    %1205 = vmatprep.mubr.bf16.mxu0 %v594
    %1206 = vmatmul.mubr.bf16.gmra.mrb[0].mxu0 %v593
    %v1207 = vpop.f32.mrb[0].mxu0
    %v1208 = vadd.f32 0.0, %v1207
    %v1209 = vpop.f32.mrb[0].mxu0
    %v1210 = vpop.f32.mrb[0].mxu0
    %v1211 = vadd.f32 0.0, %v1210
    %v1212 = vpop.f32.mrb[0].mxu0
    %1213 = vmatprep.mubr.bf16.mxu0 %v596
    %1214 = vmatmul.mubr.bf16.gmra.mrb[0].mxu0 %v595
    %v1215 = vpop.f32.mrb[0].mxu0
    %v1216 = vadd.f32 0.0, %v1215
    %v1217 = vpop.f32.mrb[0].mxu0
    %v1218 = vpop.f32.mrb[0].mxu0
    %v1219 = vadd.f32 0.0, %v1218
    %v1220 = vpop.f32.mrb[0].mxu0
    %1221 = vmatprep.mubr.bf16.mxu0 %v598
    %1222 = vmatmul.mubr.bf16.gmra.mrb[0].mxu0 %v597
    %v1223 = vpop.f32.mrb[0].mxu0
    %v1224 = vadd.f32 0.0, %v1223
    %v1225 = vpop.f32.mrb[0].mxu0
    %v1226 = vpop.f32.mrb[0].mxu0
    %v1227 = vadd.f32 0.0, %v1226
    %v1228 = vpop.f32.mrb[0].mxu0
    %1229 = vmatprep.mubr.bf16.mxu0 %v600
    %1230 = vmatmul.mubr.bf16.gmra.mrb[0].mxu0 %v599
    %v1231 = vpop.f32.mrb[0].mxu0
    %v1232 = vadd.f32 0.0, %v1231
    %v1233 = vpop.f32.mrb[0].mxu0
    %v1234 = vpop.f32.mrb[0].mxu0
    %v1235 = vadd.f32 0.0, %v1234
    %v1236 = vpop.f32.mrb[0].mxu0
    %1237 = vmatprep.mubr.bf16.mxu0 %v602
    %1238 = vmatmul.mubr.bf16.gmra.mrb[0].mxu0 %v601
    %v1239 = vpop.f32.mrb[0].mxu0
    %v1240 = vadd.f32 0.0, %v1239
    %v1241 = vpop.f32.mrb[0].mxu0
    %v1242 = vpop.f32.mrb[0].mxu0
    %v1243 = vadd.f32 0.0, %v1242
    %v1244 = vpop.f32.mrb[0].mxu0
    %1245 = vdwg.mxu0
    %v1246 = vmul.f32 %v1120, 0.1
    %v1247 = vmul.f32 %v1123, 0.1
    %v1248 = vmul.f32 %v1128, 0.1
    %v1249 = vmul.f32 %v1131, 0.1
    %v1250 = vmul.f32 %v1136, 0.1
    %v1251 = vmul.f32 %v1139, 0.1
    %v1252 = vmul.f32 %v1144, 0.1
    %v1253 = vmul.f32 %v1147, 0.1
    %v1254 = vmul.f32 %v1152, 0.1
    %v1255 = vmul.f32 %v1155, 0.1
    %v1256 = vmul.f32 %v1160, 0.1
    %v1257 = vmul.f32 %v1163, 0.1
    %v1258 = vmul.f32 %v1168, 0.1
    %v1259 = vmul.f32 %v1171, 0.1
    %v1260 = vmul.f32 %v1176, 0.1
    %v1261 = vmul.f32 %v1179, 0.1
    %v1262 = vmul.f32 %v1184, 0.1
    %v1263 = vmul.f32 %v1187, 0.1
    %v1264 = vmul.f32 %v1192, 0.1
    %v1265 = vmul.f32 %v1195, 0.1
    %v1266 = vmul.f32 %v1200, 0.1
    %v1267 = vmul.f32 %v1203, 0.1
    %v1268 = vmul.f32 %v1208, 0.1
    %v1269 = vmul.f32 %v1211, 0.1
    %v1270 = vmul.f32 %v1216, 0.1
    %v1271 = vmul.f32 %v1219, 0.1
    %v1272 = vmul.f32 %v1224, 0.1
    %v1273 = vmul.f32 %v1227, 0.1
    %v1274 = vmul.f32 %v1232, 0.1
    %v1275 = vmul.f32 %v1235, 0.1
    %v1276 = vmul.f32 %v1240, 0.1
    %v1277 = vmul.f32 %v1243, 0.1
    %v1278 = vmul.f32 %v1120, 0.7
    %v1279 = vmul.f32 %v1123, 0.7
    %v1280 = vmul.f32 %v1128, 0.7
    %v1281 = vmul.f32 %v1131, 0.7
    %v1282 = vmul.f32 %v1136, 0.7
    %v1283 = vmul.f32 %v1139, 0.7
    %v1284 = vmul.f32 %v1144, 0.7
    %v1285 = vmul.f32 %v1147, 0.7
    %v1286 = vmul.f32 %v1152, 0.7
    %v1287 = vmul.f32 %v1155, 0.7
    %v1288 = vmul.f32 %v1160, 0.7
    %v1289 = vmul.f32 %v1163, 0.7
    %v1290 = vmul.f32 %v1168, 0.7
    %v1291 = vmul.f32 %v1171, 0.7
    %v1292 = vmul.f32 %v1176, 0.7
    %v1293 = vmul.f32 %v1179, 0.7
    %v1294 = vmul.f32 %v1184, 0.7
    %v1295 = vmul.f32 %v1187, 0.7
    %v1296 = vmul.f32 %v1192, 0.7
    %v1297 = vmul.f32 %v1195, 0.7
    %v1298 = vmul.f32 %v1200, 0.7
    %v1299 = vmul.f32 %v1203, 0.7
    %v1300 = vmul.f32 %v1208, 0.7
    %v1301 = vmul.f32 %v1211, 0.7
    %v1302 = vmul.f32 %v1216, 0.7
    %v1303 = vmul.f32 %v1219, 0.7
    %v1304 = vmul.f32 %v1224, 0.7
    %v1305 = vmul.f32 %v1227, 0.7
    %v1306 = vmul.f32 %v1232, 0.7
    %v1307 = vmul.f32 %v1235, 0.7
    %v1308 = vmul.f32 %v1240, 0.7
    %v1309 = vmul.f32 %v1243, 0.7
    %v1310 = vadd.f32 %v1246, %v1278
    %v1311 = vadd.f32 %v1247, %v1279
    %v1312 = vadd.f32 %v1248, %v1280
    %v1313 = vadd.f32 %v1249, %v1281
    %v1314 = vadd.f32 %v1250, %v1282
    %v1315 = vadd.f32 %v1251, %v1283
    %v1316 = vadd.f32 %v1252, %v1284
    %v1317 = vadd.f32 %v1253, %v1285
    %v1318 = vadd.f32 %v1254, %v1286
    %v1319 = vadd.f32 %v1255, %v1287
    %v1320 = vadd.f32 %v1256, %v1288
    %v1321 = vadd.f32 %v1257, %v1289
    %v1322 = vadd.f32 %v1258, %v1290
    %v1323 = vadd.f32 %v1259, %v1291
    %v1324 = vadd.f32 %v1260, %v1292
    %v1325 = vadd.f32 %v1261, %v1293
    %v1326 = vadd.f32 %v1262, %v1294
    %v1327 = vadd.f32 %v1263, %v1295
    %v1328 = vadd.f32 %v1264, %v1296
    %v1329 = vadd.f32 %v1265, %v1297
    %v1330 = vadd.f32 %v1266, %v1298
    %v1331 = vadd.f32 %v1267, %v1299
    %v1332 = vadd.f32 %v1268, %v1300
    %v1333 = vadd.f32 %v1269, %v1301
    %v1334 = vadd.f32 %v1270, %v1302
    %v1335 = vadd.f32 %v1271, %v1303
    %v1336 = vadd.f32 %v1272, %v1304
    %v1337 = vadd.f32 %v1273, %v1305
    %v1338 = vadd.f32 %v1274, %v1306
    %v1339 = vadd.f32 %v1275, %v1307
    %v1340 = vadd.f32 %v1276, %v1308
    %v1341 = vadd.f32 %v1277, %v1309
    %v1342 = vpack.c.bf16 %v1123, %v1120
    %v1343 = vpack.c.bf16 %v1131, %v1128
    %v1344 = vpack.c.bf16 %v1139, %v1136
    %v1345 = vpack.c.bf16 %v1147, %v1144
    %v1346 = vpack.c.bf16 %v1155, %v1152
    %v1347 = vpack.c.bf16 %v1163, %v1160
    %v1348 = vpack.c.bf16 %v1171, %v1168
    %v1349 = vpack.c.bf16 %v1179, %v1176
    %v1350 = vpack.c.bf16 %v1187, %v1184
    %v1351 = vpack.c.bf16 %v1195, %v1192
    %v1352 = vpack.c.bf16 %v1203, %v1200
    %v1353 = vpack.c.bf16 %v1211, %v1208
    %v1354 = vpack.c.bf16 %v1219, %v1216
    %v1355 = vpack.c.bf16 %v1227, %v1224
    %v1356 = vpack.c.bf16 %v1235, %v1232
    %v1357 = vpack.c.bf16 %v1243, %v1240
    %v1390 = vunpack.c.l.b16 %v154
    %v1391 = vunpack.c.h.b16 %v154
    %v1392 = vunpack.c.l.b16 %v155
    %v1393 = vunpack.c.h.b16 %v155
    %v1394 = vunpack.c.l.b16 %v156
    %v1395 = vunpack.c.h.b16 %v156
    %v1396 = vunpack.c.l.b16 %v157
    %v1397 = vunpack.c.h.b16 %v157
    %v1398 = vunpack.c.l.b16 %v158
    %v1399 = vunpack.c.h.b16 %v158
    %v1400 = vunpack.c.l.b16 %v159
    %v1401 = vunpack.c.h.b16 %v159
    %v1402 = vunpack.c.l.b16 %v160
    %v1403 = vunpack.c.h.b16 %v160
    %v1404 = vunpack.c.l.b16 %v161
    %v1405 = vunpack.c.h.b16 %v161
    %v1406 = vunpack.c.l.b16 %v162
    %v1407 = vunpack.c.h.b16 %v162
    %v1408 = vunpack.c.l.b16 %v163
    %v1409 = vunpack.c.h.b16 %v163
    %v1410 = vunpack.c.l.b16 %v164
    %v1411 = vunpack.c.h.b16 %v164
    %v1412 = vunpack.c.l.b16 %v165
    %v1413 = vunpack.c.h.b16 %v165
    %v1414 = vunpack.c.l.b16 %v166
    %v1415 = vunpack.c.h.b16 %v166
    %v1416 = vunpack.c.l.b16 %v167
    %v1417 = vunpack.c.h.b16 %v167
    %v1418 = vunpack.c.l.b16 %v168
    %v1419 = vunpack.c.h.b16 %v168
    %v1420 = vunpack.c.l.b16 %v169
    %v1421 = vunpack.c.h.b16 %v169
    %v1422 = vunpack.c.l.b16 %v170
    %v1423 = vunpack.c.h.b16 %v170
    %v1424 = vunpack.c.l.b16 %v171
    %v1425 = vunpack.c.h.b16 %v171
    %v1426 = vunpack.c.l.b16 %v172
    %v1427 = vunpack.c.h.b16 %v172
    %v1428 = vunpack.c.l.b16 %v173
    %v1429 = vunpack.c.h.b16 %v173
    %v1430 = vunpack.c.l.b16 %v174
    %v1431 = vunpack.c.h.b16 %v174
    %v1432 = vunpack.c.l.b16 %v175
    %v1433 = vunpack.c.h.b16 %v175
    %v1434 = vunpack.c.l.b16 %v176
    %v1435 = vunpack.c.h.b16 %v176
    %v1436 = vunpack.c.l.b16 %v177
    %v1437 = vunpack.c.h.b16 %v177
    %v1438 = vunpack.c.l.b16 %v178
    %v1439 = vunpack.c.h.b16 %v178
    %v1440 = vunpack.c.l.b16 %v179
    %v1441 = vunpack.c.h.b16 %v179
    %v1442 = vunpack.c.l.b16 %v180
    %v1443 = vunpack.c.h.b16 %v180
    %v1444 = vunpack.c.l.b16 %v181
    %v1445 = vunpack.c.h.b16 %v181
    %v1446 = vunpack.c.l.b16 %v182
    %v1447 = vunpack.c.h.b16 %v182
    %v1448 = vunpack.c.l.b16 %v183
    %v1449 = vunpack.c.h.b16 %v183
    %v1450 = vunpack.c.l.b16 %v184
    %v1451 = vunpack.c.h.b16 %v184
    %v1452 = vunpack.c.l.b16 %v185
    %v1453 = vunpack.c.h.b16 %v185
    %v1454 = vpack.c.b16 %v1392, %v1390
    %v1455 = vpack.c.b16 %v1393, %v1391
    %v1456 = vpack.c.b16 %v1396, %v1394
    %v1457 = vpack.c.b16 %v1397, %v1395
    %v1458 = vpack.c.b16 %v1400, %v1398
    %v1459 = vpack.c.b16 %v1401, %v1399
    %v1460 = vpack.c.b16 %v1404, %v1402
    %v1461 = vpack.c.b16 %v1405, %v1403
    %v1462 = vpack.c.b16 %v1408, %v1406
    %v1463 = vpack.c.b16 %v1409, %v1407
    %v1464 = vpack.c.b16 %v1412, %v1410
    %v1465 = vpack.c.b16 %v1413, %v1411
    %v1466 = vpack.c.b16 %v1416, %v1414
    %v1467 = vpack.c.b16 %v1417, %v1415
    %v1468 = vpack.c.b16 %v1420, %v1418
    %v1469 = vpack.c.b16 %v1421, %v1419
    %v1470 = vpack.c.b16 %v1424, %v1422
    %v1471 = vpack.c.b16 %v1425, %v1423
    %v1472 = vpack.c.b16 %v1428, %v1426
    %v1473 = vpack.c.b16 %v1429, %v1427
    %v1474 = vpack.c.b16 %v1432, %v1430
    %v1475 = vpack.c.b16 %v1433, %v1431
    %v1476 = vpack.c.b16 %v1436, %v1434
    %v1477 = vpack.c.b16 %v1437, %v1435
    %v1478 = vpack.c.b16 %v1440, %v1438
    %v1479 = vpack.c.b16 %v1441, %v1439
    %v1480 = vpack.c.b16 %v1444, %v1442
    %v1481 = vpack.c.b16 %v1445, %v1443
    %v1482 = vpack.c.b16 %v1448, %v1446
    %v1483 = vpack.c.b16 %v1449, %v1447
    %v1484 = vpack.c.b16 %v1452, %v1450
    %v1485 = vpack.c.b16 %v1453, %v1451
    %1518 = vmatprep.subr.bf16.mxu0 0
    %1519 = vmatpush1.bf16.msra.mxu0 %v1342
    %1520 = vmatprep.subr.bf16.mxu0 0
    %1521 = vmatpush1.bf16.msra.mxu0 %v1343
    %1522 = vmatprep.subr.bf16.mxu0 0
    %1523 = vmatpush1.bf16.msra.mxu0 %v1344
    %1524 = vmatprep.subr.bf16.mxu0 0
    %1525 = vmatpush1.bf16.msra.mxu0 %v1345
    %1526 = vmatprep.subr.bf16.mxu0 0
    %1527 = vmatpush1.bf16.msra.mxu0 %v1346
    %1528 = vmatprep.subr.bf16.mxu0 0
    %1529 = vmatpush1.bf16.msra.mxu0 %v1347
    %1530 = vmatprep.subr.bf16.mxu0 0
    %1531 = vmatpush1.bf16.msra.mxu0 %v1348
    %1532 = vmatprep.subr.bf16.mxu0 0
    %1533 = vmatpush1.bf16.msra.mxu0 %v1349
    %1534 = vmatprep.subr.bf16.mxu0 0
    %1535 = vmatpush1.bf16.msra.mxu0 %v1350
    %1536 = vmatprep.subr.bf16.mxu0 0
    %1537 = vmatpush1.bf16.msra.mxu0 %v1351
    %1538 = vmatprep.subr.bf16.mxu0 0
    %1539 = vmatpush1.bf16.msra.mxu0 %v1352
    %1540 = vmatprep.subr.bf16.mxu0 0
    %1541 = vmatpush1.bf16.msra.mxu0 %v1353
    %1542 = vmatprep.subr.bf16.mxu0 0
    %1543 = vmatpush1.bf16.msra.mxu0 %v1354
    %1544 = vmatprep.subr.bf16.mxu0 0
    %1545 = vmatpush1.bf16.msra.mxu0 %v1355
    %1546 = vmatprep.subr.bf16.mxu0 0
    %1547 = vmatpush1.bf16.msra.mxu0 %v1356
    %1548 = vmatprep.subr.bf16.mxu0 0
    %1549 = vmatpush1.bf16.msra.mxu0 %v1357
    %1550 = vmatprep.mubr.bf16.mxu0 %v1455
    %1551 = vmatmul.mubr.bf16.gmra.mrb[0].mxu0 %v1454
    %v1552 = vpop.f32.mrb[0].mxu0
    %v1553 = vadd.f32 0.0, %v1552
    %v1554 = vpop.f32.mrb[0].mxu0
    %v1555 = vpop.f32.mrb[0].mxu0
    %v1556 = vadd.f32 0.0, %v1555
    %v1557 = vpop.f32.mrb[0].mxu0
    %1558 = vmatprep.mubr.bf16.mxu0 %v1457
    %1559 = vmatmul.mubr.bf16.gmra.mrb[0].mxu0 %v1456
    %v1560 = vpop.f32.mrb[0].mxu0
    %v1561 = vadd.f32 0.0, %v1560
    %v1562 = vpop.f32.mrb[0].mxu0
    %v1563 = vpop.f32.mrb[0].mxu0
    %v1564 = vadd.f32 0.0, %v1563
    %v1565 = vpop.f32.mrb[0].mxu0
    %1566 = vmatprep.mubr.bf16.mxu0 %v1459
    %1567 = vmatmul.mubr.bf16.gmra.mrb[0].mxu0 %v1458
    %v1568 = vpop.f32.mrb[0].mxu0
    %v1569 = vadd.f32 0.0, %v1568
    %v1570 = vpop.f32.mrb[0].mxu0
    %v1571 = vpop.f32.mrb[0].mxu0
    %v1572 = vadd.f32 0.0, %v1571
    %v1573 = vpop.f32.mrb[0].mxu0
    %1574 = vmatprep.mubr.bf16.mxu0 %v1461
    %1575 = vmatmul.mubr.bf16.gmra.mrb[0].mxu0 %v1460
    %v1576 = vpop.f32.mrb[0].mxu0
    %v1577 = vadd.f32 0.0, %v1576
    %v1578 = vpop.f32.mrb[0].mxu0
    %v1579 = vpop.f32.mrb[0].mxu0
    %v1580 = vadd.f32 0.0, %v1579
    %v1581 = vpop.f32.mrb[0].mxu0
    %1582 = vmatprep.mubr.bf16.mxu0 %v1463
    %1583 = vmatmul.mubr.bf16.gmra.mrb[0].mxu0 %v1462
    %v1584 = vpop.f32.mrb[0].mxu0
    %v1585 = vadd.f32 0.0, %v1584
    %v1586 = vpop.f32.mrb[0].mxu0
    %v1587 = vpop.f32.mrb[0].mxu0
    %v1588 = vadd.f32 0.0, %v1587
    %v1589 = vpop.f32.mrb[0].mxu0
    %1590 = vmatprep.mubr.bf16.mxu0 %v1465
    %1591 = vmatmul.mubr.bf16.gmra.mrb[0].mxu0 %v1464
    %v1592 = vpop.f32.mrb[0].mxu0
    %v1593 = vadd.f32 0.0, %v1592
    %v1594 = vpop.f32.mrb[0].mxu0
    %v1595 = vpop.f32.mrb[0].mxu0
    %v1596 = vadd.f32 0.0, %v1595
    %v1597 = vpop.f32.mrb[0].mxu0
    %1598 = vmatprep.mubr.bf16.mxu0 %v1467
    %1599 = vmatmul.mubr.bf16.gmra.mrb[0].mxu0 %v1466
    %v1600 = vpop.f32.mrb[0].mxu0
    %v1601 = vadd.f32 0.0, %v1600
    %v1602 = vpop.f32.mrb[0].mxu0
    %v1603 = vpop.f32.mrb[0].mxu0
    %v1604 = vadd.f32 0.0, %v1603
    %v1605 = vpop.f32.mrb[0].mxu0
    %1606 = vmatprep.mubr.bf16.mxu0 %v1469
    %1607 = vmatmul.mubr.bf16.gmra.mrb[0].mxu0 %v1468
    %v1608 = vpop.f32.mrb[0].mxu0
    %v1609 = vadd.f32 0.0, %v1608
    %v1610 = vpop.f32.mrb[0].mxu0
    %v1611 = vpop.f32.mrb[0].mxu0
    %v1612 = vadd.f32 0.0, %v1611
    %v1613 = vpop.f32.mrb[0].mxu0
    %1614 = vmatprep.mubr.bf16.mxu0 %v1471
    %1615 = vmatmul.mubr.bf16.gmra.mrb[0].mxu0 %v1470
    %v1616 = vpop.f32.mrb[0].mxu0
    %v1617 = vadd.f32 0.0, %v1616
    %v1618 = vpop.f32.mrb[0].mxu0
    %v1619 = vpop.f32.mrb[0].mxu0
    %v1620 = vadd.f32 0.0, %v1619
    %v1621 = vpop.f32.mrb[0].mxu0
    %1622 = vmatprep.mubr.bf16.mxu0 %v1473
    %1623 = vmatmul.mubr.bf16.gmra.mrb[0].mxu0 %v1472
    %v1624 = vpop.f32.mrb[0].mxu0
    %v1625 = vadd.f32 0.0, %v1624
    %v1626 = vpop.f32.mrb[0].mxu0
    %v1627 = vpop.f32.mrb[0].mxu0
    %v1628 = vadd.f32 0.0, %v1627
    %v1629 = vpop.f32.mrb[0].mxu0
    %1630 = vmatprep.mubr.bf16.mxu0 %v1475
    %1631 = vmatmul.mubr.bf16.gmra.mrb[0].mxu0 %v1474
    %v1632 = vpop.f32.mrb[0].mxu0
    %v1633 = vadd.f32 0.0, %v1632
    %v1634 = vpop.f32.mrb[0].mxu0
    %v1635 = vpop.f32.mrb[0].mxu0
    %v1636 = vadd.f32 0.0, %v1635
    %v1637 = vpop.f32.mrb[0].mxu0
    %1638 = vmatprep.mubr.bf16.mxu0 %v1477
    %1639 = vmatmul.mubr.bf16.gmra.mrb[0].mxu0 %v1476
    %v1640 = vpop.f32.mrb[0].mxu0
    %v1641 = vadd.f32 0.0, %v1640
    %v1642 = vpop.f32.mrb[0].mxu0
    %v1643 = vpop.f32.mrb[0].mxu0
    %v1644 = vadd.f32 0.0, %v1643
    %v1645 = vpop.f32.mrb[0].mxu0
    %1646 = vmatprep.mubr.bf16.mxu0 %v1479
    %1647 = vmatmul.mubr.bf16.gmra.mrb[0].mxu0 %v1478
    %v1648 = vpop.f32.mrb[0].mxu0
    %v1649 = vadd.f32 0.0, %v1648
    %v1650 = vpop.f32.mrb[0].mxu0
    %v1651 = vpop.f32.mrb[0].mxu0
    %v1652 = vadd.f32 0.0, %v1651
    %v1653 = vpop.f32.mrb[0].mxu0
    %1654 = vmatprep.mubr.bf16.mxu0 %v1481
    %1655 = vmatmul.mubr.bf16.gmra.mrb[0].mxu0 %v1480
    %v1656 = vpop.f32.mrb[0].mxu0
    %v1657 = vadd.f32 0.0, %v1656
    %v1658 = vpop.f32.mrb[0].mxu0
    %v1659 = vpop.f32.mrb[0].mxu0
    %v1660 = vadd.f32 0.0, %v1659
    %v1661 = vpop.f32.mrb[0].mxu0
    %1662 = vmatprep.mubr.bf16.mxu0 %v1483
    %1663 = vmatmul.mubr.bf16.gmra.mrb[0].mxu0 %v1482
    %v1664 = vpop.f32.mrb[0].mxu0
    %v1665 = vadd.f32 0.0, %v1664
    %v1666 = vpop.f32.mrb[0].mxu0
    %v1667 = vpop.f32.mrb[0].mxu0
    %v1668 = vadd.f32 0.0, %v1667
    %v1669 = vpop.f32.mrb[0].mxu0
    %1670 = vmatprep.mubr.bf16.mxu0 %v1485
    %1671 = vmatmul.mubr.bf16.gmra.mrb[0].mxu0 %v1484
    %v1672 = vpop.f32.mrb[0].mxu0
    %v1673 = vadd.f32 0.0, %v1672
    %v1674 = vpop.f32.mrb[0].mxu0
    %v1675 = vpop.f32.mrb[0].mxu0
    %v1676 = vadd.f32 0.0, %v1675
    %v1677 = vpop.f32.mrb[0].mxu0
    %1678 = vdwg.mxu0
    %v1679 = vadd.f32 %v1310, %v1553
    %v1680 = vadd.f32 %v1311, %v1556
    %v1681 = vadd.f32 %v1312, %v1561
    %v1682 = vadd.f32 %v1313, %v1564
    %v1683 = vadd.f32 %v1314, %v1569
    %v1684 = vadd.f32 %v1315, %v1572
    %v1685 = vadd.f32 %v1316, %v1577
    %v1686 = vadd.f32 %v1317, %v1580
    %v1687 = vadd.f32 %v1318, %v1585
    %v1688 = vadd.f32 %v1319, %v1588
    %v1689 = vadd.f32 %v1320, %v1593
    %v1690 = vadd.f32 %v1321, %v1596
    %v1691 = vadd.f32 %v1322, %v1601
    %v1692 = vadd.f32 %v1323, %v1604
    %v1693 = vadd.f32 %v1324, %v1609
    %v1694 = vadd.f32 %v1325, %v1612
    %v1695 = vadd.f32 %v1326, %v1617
    %v1696 = vadd.f32 %v1327, %v1620
    %v1697 = vadd.f32 %v1328, %v1625
    %v1698 = vadd.f32 %v1329, %v1628
    %v1699 = vadd.f32 %v1330, %v1633
    %v1700 = vadd.f32 %v1331, %v1636
    %v1701 = vadd.f32 %v1332, %v1641
    %v1702 = vadd.f32 %v1333, %v1644
    %v1703 = vadd.f32 %v1334, %v1649
    %v1704 = vadd.f32 %v1335, %v1652
    %v1705 = vadd.f32 %v1336, %v1657
    %v1706 = vadd.f32 %v1337, %v1660
    %v1707 = vadd.f32 %v1338, %v1665
    %v1708 = vadd.f32 %v1339, %v1668
    %v1709 = vadd.f32 %v1340, %v1673
    %v1710 = vadd.f32 %v1341, %v1676
    %v1711 = vmul.f32 %v1679, 0.7
    %v1712 = vmul.f32 %v1680, 0.7
    %v1713 = vmul.f32 %v1681, 0.7
    %v1714 = vmul.f32 %v1682, 0.7
    %v1715 = vmul.f32 %v1683, 0.7
    %v1716 = vmul.f32 %v1684, 0.7
    %v1717 = vmul.f32 %v1685, 0.7
    %v1718 = vmul.f32 %v1686, 0.7
    %v1719 = vmul.f32 %v1687, 0.7
    %v1720 = vmul.f32 %v1688, 0.7
    %v1721 = vmul.f32 %v1689, 0.7
    %v1722 = vmul.f32 %v1690, 0.7
    %v1723 = vmul.f32 %v1691, 0.7
    %v1724 = vmul.f32 %v1692, 0.7
    %v1725 = vmul.f32 %v1693, 0.7
    %v1726 = vmul.f32 %v1694, 0.7
    %v1727 = vmul.f32 %v1695, 0.7
    %v1728 = vmul.f32 %v1696, 0.7
    %v1729 = vmul.f32 %v1697, 0.7
    %v1730 = vmul.f32 %v1698, 0.7
    %v1731 = vmul.f32 %v1699, 0.7
    %v1732 = vmul.f32 %v1700, 0.7
    %v1733 = vmul.f32 %v1701, 0.7
    %v1734 = vmul.f32 %v1702, 0.7
    %v1735 = vmul.f32 %v1703, 0.7
    %v1736 = vmul.f32 %v1704, 0.7
    %v1737 = vmul.f32 %v1705, 0.7
    %v1738 = vmul.f32 %v1706, 0.7
    %v1739 = vmul.f32 %v1707, 0.7
    %v1740 = vmul.f32 %v1708, 0.7
    %v1741 = vmul.f32 %v1709, 0.7
    %v1742 = vmul.f32 %v1710, 0.7
    %v1743 = vadd.f32 %v1246, %v1711
    %v1744 = vadd.f32 %v1247, %v1712
    %v1745 = vadd.f32 %v1248, %v1713
    %v1746 = vadd.f32 %v1249, %v1714
    %v1747 = vadd.f32 %v1250, %v1715
    %v1748 = vadd.f32 %v1251, %v1716
    %v1749 = vadd.f32 %v1252, %v1717
    %v1750 = vadd.f32 %v1253, %v1718
    %v1751 = vadd.f32 %v1254, %v1719
    %v1752 = vadd.f32 %v1255, %v1720
    %v1753 = vadd.f32 %v1256, %v1721
    %v1754 = vadd.f32 %v1257, %v1722
    %v1755 = vadd.f32 %v1258, %v1723
    %v1756 = vadd.f32 %v1259, %v1724
    %v1757 = vadd.f32 %v1260, %v1725
    %v1758 = vadd.f32 %v1261, %v1726
    %v1759 = vadd.f32 %v1262, %v1727
    %v1760 = vadd.f32 %v1263, %v1728
    %v1761 = vadd.f32 %v1264, %v1729
    %v1762 = vadd.f32 %v1265, %v1730
    %v1763 = vadd.f32 %v1266, %v1731
    %v1764 = vadd.f32 %v1267, %v1732
    %v1765 = vadd.f32 %v1268, %v1733
    %v1766 = vadd.f32 %v1269, %v1734
    %v1767 = vadd.f32 %v1270, %v1735
    %v1768 = vadd.f32 %v1271, %v1736
    %v1769 = vadd.f32 %v1272, %v1737
    %v1770 = vadd.f32 %v1273, %v1738
    %v1771 = vadd.f32 %v1274, %v1739
    %v1772 = vadd.f32 %v1275, %v1740
    %v1773 = vadd.f32 %v1276, %v1741
    %v1774 = vadd.f32 %v1277, %v1742
    %v1775 = vpack.c.bf16 %v1680, %v1679
    %v1776 = vpack.c.bf16 %v1682, %v1681
    %v1777 = vpack.c.bf16 %v1684, %v1683
    %v1778 = vpack.c.bf16 %v1686, %v1685
    %v1779 = vpack.c.bf16 %v1688, %v1687
    %v1780 = vpack.c.bf16 %v1690, %v1689
    %v1781 = vpack.c.bf16 %v1692, %v1691
    %v1782 = vpack.c.bf16 %v1694, %v1693
    %v1783 = vpack.c.bf16 %v1696, %v1695
    %v1784 = vpack.c.bf16 %v1698, %v1697
    %v1785 = vpack.c.bf16 %v1700, %v1699
    %v1786 = vpack.c.bf16 %v1702, %v1701
    %v1787 = vpack.c.bf16 %v1704, %v1703
    %v1788 = vpack.c.bf16 %v1706, %v1705
    %v1789 = vpack.c.bf16 %v1708, %v1707
    %v1790 = vpack.c.bf16 %v1710, %v1709
    %1791 = vmatprep.subr.bf16.mxu0 0
    %1792 = vmatpush1.bf16.msra.mxu0 %v1775
    %1793 = vmatprep.subr.bf16.mxu0 0
    %1794 = vmatpush1.bf16.msra.mxu0 %v1776
    %1795 = vmatprep.subr.bf16.mxu0 0
    %1796 = vmatpush1.bf16.msra.mxu0 %v1777
    %1797 = vmatprep.subr.bf16.mxu0 0
    %1798 = vmatpush1.bf16.msra.mxu0 %v1778
    %1799 = vmatprep.subr.bf16.mxu0 0
    %1800 = vmatpush1.bf16.msra.mxu0 %v1779
    %1801 = vmatprep.subr.bf16.mxu0 0
    %1802 = vmatpush1.bf16.msra.mxu0 %v1780
    %1803 = vmatprep.subr.bf16.mxu0 0
    %1804 = vmatpush1.bf16.msra.mxu0 %v1781
    %1805 = vmatprep.subr.bf16.mxu0 0
    %1806 = vmatpush1.bf16.msra.mxu0 %v1782
    %1807 = vmatprep.subr.bf16.mxu0 0
    %1808 = vmatpush1.bf16.msra.mxu0 %v1783
    %1809 = vmatprep.subr.bf16.mxu0 0
    %1810 = vmatpush1.bf16.msra.mxu0 %v1784
    %1811 = vmatprep.subr.bf16.mxu0 0
    %1812 = vmatpush1.bf16.msra.mxu0 %v1785
    %1813 = vmatprep.subr.bf16.mxu0 0
    %1814 = vmatpush1.bf16.msra.mxu0 %v1786
    %1815 = vmatprep.subr.bf16.mxu0 0
    %1816 = vmatpush1.bf16.msra.mxu0 %v1787
    %1817 = vmatprep.subr.bf16.mxu0 0
    %1818 = vmatpush1.bf16.msra.mxu0 %v1788
    %1819 = vmatprep.subr.bf16.mxu0 0
    %1820 = vmatpush1.bf16.msra.mxu0 %v1789
    %1821 = vmatprep.subr.bf16.mxu0 0
    %1822 = vmatpush1.bf16.msra.mxu0 %v1790
    %1823 = vmatprep.mubr.bf16.mxu0 %v1455
    %1824 = vmatmul.mubr.bf16.gmra.mrb[0].mxu0 %v1454
    %v1825 = vpop.f32.mrb[0].mxu0
    %v1826 = vadd.f32 0.0, %v1825
    %v1827 = vpop.f32.mrb[0].mxu0
    %v1828 = vpop.f32.mrb[0].mxu0
    %v1829 = vadd.f32 0.0, %v1828
    %v1830 = vpop.f32.mrb[0].mxu0
    %1831 = vmatprep.mubr.bf16.mxu0 %v1457
    %1832 = vmatmul.mubr.bf16.gmra.mrb[0].mxu0 %v1456
    %v1833 = vpop.f32.mrb[0].mxu0
    %v1834 = vadd.f32 0.0, %v1833
    %v1835 = vpop.f32.mrb[0].mxu0
    %v1836 = vpop.f32.mrb[0].mxu0
    %v1837 = vadd.f32 0.0, %v1836
    %v1838 = vpop.f32.mrb[0].mxu0
    %1839 = vmatprep.mubr.bf16.mxu0 %v1459
    %1840 = vmatmul.mubr.bf16.gmra.mrb[0].mxu0 %v1458
    %v1841 = vpop.f32.mrb[0].mxu0
    %v1842 = vadd.f32 0.0, %v1841
    %v1843 = vpop.f32.mrb[0].mxu0
    %v1844 = vpop.f32.mrb[0].mxu0
    %v1845 = vadd.f32 0.0, %v1844
    %v1846 = vpop.f32.mrb[0].mxu0
    %1847 = vmatprep.mubr.bf16.mxu0 %v1461
    %1848 = vmatmul.mubr.bf16.gmra.mrb[0].mxu0 %v1460
    %v1849 = vpop.f32.mrb[0].mxu0
    %v1850 = vadd.f32 0.0, %v1849
    %v1851 = vpop.f32.mrb[0].mxu0
    %v1852 = vpop.f32.mrb[0].mxu0
    %v1853 = vadd.f32 0.0, %v1852
    %v1854 = vpop.f32.mrb[0].mxu0
    %1855 = vmatprep.mubr.bf16.mxu0 %v1463
    %1856 = vmatmul.mubr.bf16.gmra.mrb[0].mxu0 %v1462
    %v1857 = vpop.f32.mrb[0].mxu0
    %v1858 = vadd.f32 0.0, %v1857
    %v1859 = vpop.f32.mrb[0].mxu0
    %v1860 = vpop.f32.mrb[0].mxu0
    %v1861 = vadd.f32 0.0, %v1860
    %v1862 = vpop.f32.mrb[0].mxu0
    %1863 = vmatprep.mubr.bf16.mxu0 %v1465
    %1864 = vmatmul.mubr.bf16.gmra.mrb[0].mxu0 %v1464
    %v1865 = vpop.f32.mrb[0].mxu0
    %v1866 = vadd.f32 0.0, %v1865
    %v1867 = vpop.f32.mrb[0].mxu0
    %v1868 = vpop.f32.mrb[0].mxu0
    %v1869 = vadd.f32 0.0, %v1868
    %v1870 = vpop.f32.mrb[0].mxu0
    %1871 = vmatprep.mubr.bf16.mxu0 %v1467
    %1872 = vmatmul.mubr.bf16.gmra.mrb[0].mxu0 %v1466
    %v1873 = vpop.f32.mrb[0].mxu0
    %v1874 = vadd.f32 0.0, %v1873
    %v1875 = vpop.f32.mrb[0].mxu0
    %v1876 = vpop.f32.mrb[0].mxu0
    %v1877 = vadd.f32 0.0, %v1876
    %v1878 = vpop.f32.mrb[0].mxu0
    %1879 = vmatprep.mubr.bf16.mxu0 %v1469
    %1880 = vmatmul.mubr.bf16.gmra.mrb[0].mxu0 %v1468
    %v1881 = vpop.f32.mrb[0].mxu0
    %v1882 = vadd.f32 0.0, %v1881
    %v1883 = vpop.f32.mrb[0].mxu0
    %v1884 = vpop.f32.mrb[0].mxu0
    %v1885 = vadd.f32 0.0, %v1884
    %v1886 = vpop.f32.mrb[0].mxu0
    %1887 = vmatprep.mubr.bf16.mxu0 %v1471
    %1888 = vmatmul.mubr.bf16.gmra.mrb[0].mxu0 %v1470
    %v1889 = vpop.f32.mrb[0].mxu0
    %v1890 = vadd.f32 0.0, %v1889
    %v1891 = vpop.f32.mrb[0].mxu0
    %v1892 = vpop.f32.mrb[0].mxu0
    %v1893 = vadd.f32 0.0, %v1892
    %v1894 = vpop.f32.mrb[0].mxu0
    %1895 = vmatprep.mubr.bf16.mxu0 %v1473
    %1896 = vmatmul.mubr.bf16.gmra.mrb[0].mxu0 %v1472
    %v1897 = vpop.f32.mrb[0].mxu0
    %v1898 = vadd.f32 0.0, %v1897
    %v1899 = vpop.f32.mrb[0].mxu0
    %v1900 = vpop.f32.mrb[0].mxu0
    %v1901 = vadd.f32 0.0, %v1900
    %v1902 = vpop.f32.mrb[0].mxu0
    %1903 = vmatprep.mubr.bf16.mxu0 %v1475
    %1904 = vmatmul.mubr.bf16.gmra.mrb[0].mxu0 %v1474
    %v1905 = vpop.f32.mrb[0].mxu0
    %v1906 = vadd.f32 0.0, %v1905
    %v1907 = vpop.f32.mrb[0].mxu0
    %v1908 = vpop.f32.mrb[0].mxu0
    %v1909 = vadd.f32 0.0, %v1908
    %v1910 = vpop.f32.mrb[0].mxu0
    %1911 = vmatprep.mubr.bf16.mxu0 %v1477
    %1912 = vmatmul.mubr.bf16.gmra.mrb[0].mxu0 %v1476
    %v1913 = vpop.f32.mrb[0].mxu0
    %v1914 = vadd.f32 0.0, %v1913
    %v1915 = vpop.f32.mrb[0].mxu0
    %v1916 = vpop.f32.mrb[0].mxu0
    %v1917 = vadd.f32 0.0, %v1916
    %v1918 = vpop.f32.mrb[0].mxu0
    %1919 = vmatprep.mubr.bf16.mxu0 %v1479
    %1920 = vmatmul.mubr.bf16.gmra.mrb[0].mxu0 %v1478
    %v1921 = vpop.f32.mrb[0].mxu0
    %v1922 = vadd.f32 0.0, %v1921
    %v1923 = vpop.f32.mrb[0].mxu0
    %v1924 = vpop.f32.mrb[0].mxu0
    %v1925 = vadd.f32 0.0, %v1924
    %v1926 = vpop.f32.mrb[0].mxu0
    %1927 = vmatprep.mubr.bf16.mxu0 %v1481
    %1928 = vmatmul.mubr.bf16.gmra.mrb[0].mxu0 %v1480
    %v1929 = vpop.f32.mrb[0].mxu0
    %v1930 = vadd.f32 0.0, %v1929
    %v1931 = vpop.f32.mrb[0].mxu0
    %v1932 = vpop.f32.mrb[0].mxu0
    %v1933 = vadd.f32 0.0, %v1932
    %v1934 = vpop.f32.mrb[0].mxu0
    %1935 = vmatprep.mubr.bf16.mxu0 %v1483
    %1936 = vmatmul.mubr.bf16.gmra.mrb[0].mxu0 %v1482
    %v1937 = vpop.f32.mrb[0].mxu0
    %v1938 = vadd.f32 0.0, %v1937
    %v1939 = vpop.f32.mrb[0].mxu0
    %v1940 = vpop.f32.mrb[0].mxu0
    %v1941 = vadd.f32 0.0, %v1940
    %v1942 = vpop.f32.mrb[0].mxu0
    %1943 = vmatprep.mubr.bf16.mxu0 %v1485
    %1944 = vmatmul.mubr.bf16.gmra.mrb[0].mxu0 %v1484
    %v1945 = vpop.f32.mrb[0].mxu0
    %v1946 = vadd.f32 0.0, %v1945
    %v1947 = vpop.f32.mrb[0].mxu0
    %v1948 = vpop.f32.mrb[0].mxu0
    %v1949 = vadd.f32 0.0, %v1948
    %v1950 = vpop.f32.mrb[0].mxu0
    %1951 = vdwg.mxu0
    %v1952 = vadd.f32 %v1743, %v1826
    %v1953 = vadd.f32 %v1744, %v1829
    %v1954 = vadd.f32 %v1745, %v1834
    %v1955 = vadd.f32 %v1746, %v1837
    %v1956 = vadd.f32 %v1747, %v1842
    %v1957 = vadd.f32 %v1748, %v1845
    %v1958 = vadd.f32 %v1749, %v1850
    %v1959 = vadd.f32 %v1750, %v1853
    %v1960 = vadd.f32 %v1751, %v1858
    %v1961 = vadd.f32 %v1752, %v1861
    %v1962 = vadd.f32 %v1753, %v1866
    %v1963 = vadd.f32 %v1754, %v1869
    %v1964 = vadd.f32 %v1755, %v1874
    %v1965 = vadd.f32 %v1756, %v1877
    %v1966 = vadd.f32 %v1757, %v1882
    %v1967 = vadd.f32 %v1758, %v1885
    %v1968 = vadd.f32 %v1759, %v1890
    %v1969 = vadd.f32 %v1760, %v1893
    %v1970 = vadd.f32 %v1761, %v1898
    %v1971 = vadd.f32 %v1762, %v1901
    %v1972 = vadd.f32 %v1763, %v1906
    %v1973 = vadd.f32 %v1764, %v1909
    %v1974 = vadd.f32 %v1765, %v1914
    %v1975 = vadd.f32 %v1766, %v1917
    %v1976 = vadd.f32 %v1767, %v1922
    %v1977 = vadd.f32 %v1768, %v1925
    %v1978 = vadd.f32 %v1769, %v1930
    %v1979 = vadd.f32 %v1770, %v1933
    %v1980 = vadd.f32 %v1771, %v1938
    %v1981 = vadd.f32 %v1772, %v1941
    %v1982 = vadd.f32 %v1773, %v1946
    %v1983 = vadd.f32 %v1774, %v1949
    %v1984 = vld [vmem:[#allocation4] sm:$0xff]
    %v1985 = vld [vmem:[#allocation4 + $0x8] sm:$0xff]
    %v1986 = vld [vmem:[#allocation4 + $0x10] sm:$0xff]
    %v1987 = vld [vmem:[#allocation4 + $0x18] sm:$0xff]
    %v1988 = vld [vmem:[#allocation4 + $0x20] sm:$0xff]
    %v1989 = vld [vmem:[#allocation4 + $0x28] sm:$0xff]
    %v1990 = vld [vmem:[#allocation4 + $0x30] sm:$0xff]
    %v1991 = vld [vmem:[#allocation4 + $0x38] sm:$0xff]
    %v1992 = vld [vmem:[#allocation4 + $0x40] sm:$0xff]
    %v1993 = vld [vmem:[#allocation4 + $0x48] sm:$0xff]
    %v1994 = vld [vmem:[#allocation4 + $0x50] sm:$0xff]
    %v1995 = vld [vmem:[#allocation4 + $0x58] sm:$0xff]
    %v1996 = vld [vmem:[#allocation4 + $0x60] sm:$0xff]
    %v1997 = vld [vmem:[#allocation4 + $0x68] sm:$0xff]
    %v1998 = vld [vmem:[#allocation4 + $0x70] sm:$0xff]
    %v1999 = vld [vmem:[#allocation4 + $0x78] sm:$0xff]
    %v2000 = vld [vmem:[#allocation4 + $0x80] sm:$0xff]
    %v2001 = vld [vmem:[#allocation4 + $0x88] sm:$0xff]
    %v2002 = vld [vmem:[#allocation4 + $0x90] sm:$0xff]
    %v2003 = vld [vmem:[#allocation4 + $0x98] sm:$0xff]
    %v2004 = vld [vmem:[#allocation4 + $0xa0] sm:$0xff]
    %v2005 = vld [vmem:[#allocation4 + $0xa8] sm:$0xff]
    %v2006 = vld [vmem:[#allocation4 + $0xb0] sm:$0xff]
    %v2007 = vld [vmem:[#allocation4 + $0xb8] sm:$0xff]
    %v2008 = vld [vmem:[#allocation4 + $0xc0] sm:$0xff]
    %v2009 = vld [vmem:[#allocation4 + $0xc8] sm:$0xff]
    %v2010 = vld [vmem:[#allocation4 + $0xd0] sm:$0xff]
    %v2011 = vld [vmem:[#allocation4 + $0xd8] sm:$0xff]
    %v2012 = vld [vmem:[#allocation4 + $0xe0] sm:$0xff]
    %v2013 = vld [vmem:[#allocation4 + $0xe8] sm:$0xff]
    %v2014 = vld [vmem:[#allocation4 + $0xf0] sm:$0xff]
    %v2015 = vld [vmem:[#allocation4 + $0xf8] sm:$0xff]
    %v2016 = vmul.f32 %v1984, 0.25
    %v2017 = vmul.f32 %v1985, 0.25
    %v2018 = vmul.f32 %v1986, 0.25
    %v2019 = vmul.f32 %v1987, 0.25
    %v2020 = vmul.f32 %v1988, 0.25
    %v2021 = vmul.f32 %v1989, 0.25
    %v2022 = vmul.f32 %v1990, 0.25
    %v2023 = vmul.f32 %v1991, 0.25
    %v2024 = vmul.f32 %v1992, 0.25
    %v2025 = vmul.f32 %v1993, 0.25
    %v2026 = vmul.f32 %v1994, 0.25
    %v2027 = vmul.f32 %v1995, 0.25
    %v2028 = vmul.f32 %v1996, 0.25
    %v2029 = vmul.f32 %v1997, 0.25
    %v2030 = vmul.f32 %v1998, 0.25
    %v2031 = vmul.f32 %v1999, 0.25
    %v2032 = vmul.f32 %v2000, 0.25
    %v2033 = vmul.f32 %v2001, 0.25
    %v2034 = vmul.f32 %v2002, 0.25
    %v2035 = vmul.f32 %v2003, 0.25
    %v2036 = vmul.f32 %v2004, 0.25
    %v2037 = vmul.f32 %v2005, 0.25
    %v2038 = vmul.f32 %v2006, 0.25
    %v2039 = vmul.f32 %v2007, 0.25
    %v2040 = vmul.f32 %v2008, 0.25
    %v2041 = vmul.f32 %v2009, 0.25
    %v2042 = vmul.f32 %v2010, 0.25
    %v2043 = vmul.f32 %v2011, 0.25
    %v2044 = vmul.f32 %v2012, 0.25
    %v2045 = vmul.f32 %v2013, 0.25
    %v2046 = vmul.f32 %v2014, 0.25
    %v2047 = vmul.f32 %v2015, 0.25
    %v2048 = vmul.f32 %v1952, 0.75
    %v2049 = vmul.f32 %v1953, 0.75
    %v2050 = vmul.f32 %v1954, 0.75
    %v2051 = vmul.f32 %v1955, 0.75
    %v2052 = vmul.f32 %v1956, 0.75
    %v2053 = vmul.f32 %v1957, 0.75
    %v2054 = vmul.f32 %v1958, 0.75
    %v2055 = vmul.f32 %v1959, 0.75
    %v2056 = vmul.f32 %v1960, 0.75
    %v2057 = vmul.f32 %v1961, 0.75
    %v2058 = vmul.f32 %v1962, 0.75
    %v2059 = vmul.f32 %v1963, 0.75
    %v2060 = vmul.f32 %v1964, 0.75
    %v2061 = vmul.f32 %v1965, 0.75
    %v2062 = vmul.f32 %v1966, 0.75
    %v2063 = vmul.f32 %v1967, 0.75
    %v2064 = vmul.f32 %v1968, 0.75
    %v2065 = vmul.f32 %v1969, 0.75
    %v2066 = vmul.f32 %v1970, 0.75
    %v2067 = vmul.f32 %v1971, 0.75
    %v2068 = vmul.f32 %v1972, 0.75
    %v2069 = vmul.f32 %v1973, 0.75
    %v2070 = vmul.f32 %v1974, 0.75
    %v2071 = vmul.f32 %v1975, 0.75
    %v2072 = vmul.f32 %v1976, 0.75
    %v2073 = vmul.f32 %v1977, 0.75
    %v2074 = vmul.f32 %v1978, 0.75
    %v2075 = vmul.f32 %v1979, 0.75
    %v2076 = vmul.f32 %v1980, 0.75
    %v2077 = vmul.f32 %v1981, 0.75
    %v2078 = vmul.f32 %v1982, 0.75
    %v2079 = vmul.f32 %v1983, 0.75
    %v2080 = vadd.f32 %v2016, %v2048
    %v2081 = vadd.f32 %v2017, %v2049
    %v2082 = vadd.f32 %v2018, %v2050
    %v2083 = vadd.f32 %v2019, %v2051
    %v2084 = vadd.f32 %v2020, %v2052
    %v2085 = vadd.f32 %v2021, %v2053
    %v2086 = vadd.f32 %v2022, %v2054
    %v2087 = vadd.f32 %v2023, %v2055
    %v2088 = vadd.f32 %v2024, %v2056
    %v2089 = vadd.f32 %v2025, %v2057
    %v2090 = vadd.f32 %v2026, %v2058
    %v2091 = vadd.f32 %v2027, %v2059
    %v2092 = vadd.f32 %v2028, %v2060
    %v2093 = vadd.f32 %v2029, %v2061
    %v2094 = vadd.f32 %v2030, %v2062
    %v2095 = vadd.f32 %v2031, %v2063
    %v2096 = vadd.f32 %v2032, %v2064
    %v2097 = vadd.f32 %v2033, %v2065
    %v2098 = vadd.f32 %v2034, %v2066
    %v2099 = vadd.f32 %v2035, %v2067
    %v2100 = vadd.f32 %v2036, %v2068
    %v2101 = vadd.f32 %v2037, %v2069
    %v2102 = vadd.f32 %v2038, %v2070
    %v2103 = vadd.f32 %v2039, %v2071
    %v2104 = vadd.f32 %v2040, %v2072
    %v2105 = vadd.f32 %v2041, %v2073
    %v2106 = vadd.f32 %v2042, %v2074
    %v2107 = vadd.f32 %v2043, %v2075
    %v2108 = vadd.f32 %v2044, %v2076
    %v2109 = vadd.f32 %v2045, %v2077
    %v2110 = vadd.f32 %v2046, %v2078
    %v2111 = vadd.f32 %v2047, %v2079
    %v2112 = vmax.f32 %v2080, 0.0
    %v2113 = vmax.f32 %v2081, 0.0
    %v2114 = vmax.f32 %v2082, 0.0
    %v2115 = vmax.f32 %v2083, 0.0
    %v2116 = vmax.f32 %v2084, 0.0
    %v2117 = vmax.f32 %v2085, 0.0
    %v2118 = vmax.f32 %v2086, 0.0
    %v2119 = vmax.f32 %v2087, 0.0
    %v2120 = vmax.f32 %v2088, 0.0
    %v2121 = vmax.f32 %v2089, 0.0
    %v2122 = vmax.f32 %v2090, 0.0
    %v2123 = vmax.f32 %v2091, 0.0
    %v2124 = vmax.f32 %v2092, 0.0
    %v2125 = vmax.f32 %v2093, 0.0
    %v2126 = vmax.f32 %v2094, 0.0
    %v2127 = vmax.f32 %v2095, 0.0
    %v2128 = vmax.f32 %v2096, 0.0
    %v2129 = vmax.f32 %v2097, 0.0
    %v2130 = vmax.f32 %v2098, 0.0
    %v2131 = vmax.f32 %v2099, 0.0
    %v2132 = vmax.f32 %v2100, 0.0
    %v2133 = vmax.f32 %v2101, 0.0
    %v2134 = vmax.f32 %v2102, 0.0
    %v2135 = vmax.f32 %v2103, 0.0
    %v2136 = vmax.f32 %v2104, 0.0
    %v2137 = vmax.f32 %v2105, 0.0
    %v2138 = vmax.f32 %v2106, 0.0
    %v2139 = vmax.f32 %v2107, 0.0
    %v2140 = vmax.f32 %v2108, 0.0
    %v2141 = vmax.f32 %v2109, 0.0
    %v2142 = vmax.f32 %v2110, 0.0
    %v2143 = vmax.f32 %v2111, 0.0
    %v2144 = vpack.c.bf16 %v2113, %v2112
    %v2145 = vpack.c.bf16 %v2115, %v2114
    %v2146 = vpack.c.bf16 %v2117, %v2116
    %v2147 = vpack.c.bf16 %v2119, %v2118
    %v2148 = vpack.c.bf16 %v2121, %v2120
    %v2149 = vpack.c.bf16 %v2123, %v2122
    %v2150 = vpack.c.bf16 %v2125, %v2124
    %v2151 = vpack.c.bf16 %v2127, %v2126
    %v2152 = vpack.c.bf16 %v2129, %v2128
    %v2153 = vpack.c.bf16 %v2131, %v2130
    %v2154 = vpack.c.bf16 %v2133, %v2132
    %v2155 = vpack.c.bf16 %v2135, %v2134
    %v2156 = vpack.c.bf16 %v2137, %v2136
    %v2157 = vpack.c.bf16 %v2139, %v2138
    %v2158 = vpack.c.bf16 %v2141, %v2140
    %v2159 = vpack.c.bf16 %v2143, %v2142
    %v2160 = vld [vmem:[#allocation12] sm:$0xf]
    %v2161 = vld [vmem:[#allocation12 + $0x4] sm:$0xf]
    %v2162 = vld [vmem:[#allocation12 + $0x8] sm:$0xf]
    %v2163 = vld [vmem:[#allocation12 + $0xc] sm:$0xf]
    %v2164 = vld [vmem:[#allocation12 + $0x10] sm:$0xf]
    %v2165 = vld [vmem:[#allocation12 + $0x14] sm:$0xf]
    %v2166 = vld [vmem:[#allocation12 + $0x18] sm:$0xf]
    %v2167 = vld [vmem:[#allocation12 + $0x1c] sm:$0xf]
    %v2168 = vld [vmem:[#allocation12 + $0x20] sm:$0xf]
    %v2169 = vld [vmem:[#allocation12 + $0x24] sm:$0xf]
    %v2170 = vld [vmem:[#allocation12 + $0x28] sm:$0xf]
    %v2171 = vld [vmem:[#allocation12 + $0x2c] sm:$0xf]
    %v2172 = vld [vmem:[#allocation12 + $0x30] sm:$0xf]
    %v2173 = vld [vmem:[#allocation12 + $0x34] sm:$0xf]
    %v2174 = vld [vmem:[#allocation12 + $0x38] sm:$0xf]
    %v2175 = vld [vmem:[#allocation12 + $0x3c] sm:$0xf]
    %v2192 = vunpack.c.l.b16 %v2160
    %v2193 = vunpack.c.l.b16 %v2161
    %v2194 = vunpack.c.l.b16 %v2162
    %v2195 = vunpack.c.l.b16 %v2163
    %v2196 = vunpack.c.l.b16 %v2164
    %v2197 = vunpack.c.l.b16 %v2165
    %v2198 = vunpack.c.l.b16 %v2166
    %v2199 = vunpack.c.l.b16 %v2167
    %v2200 = vunpack.c.l.b16 %v2168
    %v2201 = vunpack.c.l.b16 %v2169
    %v2202 = vunpack.c.l.b16 %v2170
    %v2203 = vunpack.c.l.b16 %v2171
    %v2204 = vunpack.c.l.b16 %v2172
    %v2205 = vunpack.c.l.b16 %v2173
    %v2206 = vunpack.c.l.b16 %v2174
    %v2207 = vunpack.c.l.b16 %v2175
    %v2208 = vpack.c.b16 %v2193, %v2192
    %v2209 = vpack.c.b16 %v2195, %v2194
    %v2210 = vpack.c.b16 %v2197, %v2196
    %v2211 = vpack.c.b16 %v2199, %v2198
    %v2212 = vpack.c.b16 %v2201, %v2200
    %v2213 = vpack.c.b16 %v2203, %v2202
    %v2214 = vpack.c.b16 %v2205, %v2204
    %v2215 = vpack.c.b16 %v2207, %v2206
    %2224 = vmatprep.subr.bf16.mxu0 0
    %2225 = vmatpush1.bf16.msra.mxu0 %v2208
    %2226 = vmatprep.subr.bf16.mxu0 0
    %2227 = vmatpush1.bf16.msra.mxu0 %v2209
    %2228 = vmatprep.subr.bf16.mxu0 0
    %2229 = vmatpush1.bf16.msra.mxu0 %v2210
    %2230 = vmatprep.subr.bf16.mxu0 0
    %2231 = vmatpush1.bf16.msra.mxu0 %v2211
    %2232 = vmatprep.subr.bf16.mxu0 0
    %2233 = vmatpush1.bf16.msra.mxu0 %v2212
    %2234 = vmatprep.subr.bf16.mxu0 0
    %2235 = vmatpush1.bf16.msra.mxu0 %v2213
    %2236 = vmatprep.subr.bf16.mxu0 0
    %2237 = vmatpush1.bf16.msra.mxu0 %v2214
    %2238 = vmatprep.subr.bf16.mxu0 0
    %2239 = vmatpush1.bf16.msra.mxu0 %v2215
    %2240 = vmatprep.subr.bf16.mxu0 0
    %2241 = vmatpush1.bf16.msra.mxu0 0
    %2242 = vmatprep.subr.bf16.mxu0 0
    %2243 = vmatpush1.bf16.msra.mxu0 0
    %2244 = vmatprep.subr.bf16.mxu0 0
    %2245 = vmatpush1.bf16.msra.mxu0 0
    %2246 = vmatprep.subr.bf16.mxu0 0
    %2247 = vmatpush1.bf16.msra.mxu0 0
    %2248 = vmatprep.subr.bf16.mxu0 0
    %2249 = vmatpush1.bf16.msra.mxu0 0
    %2250 = vmatprep.subr.bf16.mxu0 0
    %2251 = vmatpush1.bf16.msra.mxu0 0
    %2252 = vmatprep.subr.bf16.mxu0 0
    %2253 = vmatpush1.bf16.msra.mxu0 0
    %2254 = vmatprep.subr.bf16.mxu0 0
    %2255 = vmatpush1.bf16.msra.mxu0 0
    %2256 = vmatprep.mubr.bf16.mxu0 0
    %2257 = vmatmul.mubr.bf16.gmra.mrb[0].mxu0 %v2144
    %v2258 = vpop.f32.mrb[0].mxu0
    %v2259 = vadd.f32 0.0, %v2258
    %v2260 = vpop.f32.mrb[0].mxu0
    %v2261 = vpop.f32.mrb[0].mxu0
    %v2262 = vadd.f32 0.0, %v2261
    %v2263 = vpop.f32.mrb[0].mxu0
    %2264 = vmatprep.mubr.bf16.mxu0 0
    %2265 = vmatmul.mubr.bf16.gmra.mrb[0].mxu0 %v2145
    %v2266 = vpop.f32.mrb[0].mxu0
    %v2267 = vadd.f32 0.0, %v2266
    %v2268 = vpop.f32.mrb[0].mxu0
    %v2269 = vpop.f32.mrb[0].mxu0
    %v2270 = vadd.f32 0.0, %v2269
    %v2271 = vpop.f32.mrb[0].mxu0
    %2272 = vmatprep.mubr.bf16.mxu0 0
    %2273 = vmatmul.mubr.bf16.gmra.mrb[0].mxu0 %v2146
    %v2274 = vpop.f32.mrb[0].mxu0
    %v2275 = vadd.f32 0.0, %v2274
    %v2276 = vpop.f32.mrb[0].mxu0
    %v2277 = vpop.f32.mrb[0].mxu0
    %v2278 = vadd.f32 0.0, %v2277
    %v2279 = vpop.f32.mrb[0].mxu0
    %2280 = vmatprep.mubr.bf16.mxu0 0
    %2281 = vmatmul.mubr.bf16.gmra.mrb[0].mxu0 %v2147
    %v2282 = vpop.f32.mrb[0].mxu0
    %v2283 = vadd.f32 0.0, %v2282
    %v2284 = vpop.f32.mrb[0].mxu0
    %v2285 = vpop.f32.mrb[0].mxu0
    %v2286 = vadd.f32 0.0, %v2285
    %v2287 = vpop.f32.mrb[0].mxu0
    %2288 = vmatprep.mubr.bf16.mxu0 0
    %2289 = vmatmul.mubr.bf16.gmra.mrb[0].mxu0 %v2148
    %v2290 = vpop.f32.mrb[0].mxu0
    %v2291 = vadd.f32 0.0, %v2290
    %v2292 = vpop.f32.mrb[0].mxu0
    %v2293 = vpop.f32.mrb[0].mxu0
    %v2294 = vadd.f32 0.0, %v2293
    %v2295 = vpop.f32.mrb[0].mxu0
    %2296 = vmatprep.mubr.bf16.mxu0 0
    %2297 = vmatmul.mubr.bf16.gmra.mrb[0].mxu0 %v2149
    %v2298 = vpop.f32.mrb[0].mxu0
    %v2299 = vadd.f32 0.0, %v2298
    %v2300 = vpop.f32.mrb[0].mxu0
    %v2301 = vpop.f32.mrb[0].mxu0
    %v2302 = vadd.f32 0.0, %v2301
    %v2303 = vpop.f32.mrb[0].mxu0
    %2304 = vmatprep.mubr.bf16.mxu0 0
    %2305 = vmatmul.mubr.bf16.gmra.mrb[0].mxu0 %v2150
    %v2306 = vpop.f32.mrb[0].mxu0
    %v2307 = vadd.f32 0.0, %v2306
    %v2308 = vpop.f32.mrb[0].mxu0
    %v2309 = vpop.f32.mrb[0].mxu0
    %v2310 = vadd.f32 0.0, %v2309
    %v2311 = vpop.f32.mrb[0].mxu0
    %2312 = vmatprep.mubr.bf16.mxu0 0
    %2313 = vmatmul.mubr.bf16.gmra.mrb[0].mxu0 %v2151
    %v2314 = vpop.f32.mrb[0].mxu0
    %v2315 = vadd.f32 0.0, %v2314
    %v2316 = vpop.f32.mrb[0].mxu0
    %v2317 = vpop.f32.mrb[0].mxu0
    %v2318 = vadd.f32 0.0, %v2317
    %v2319 = vpop.f32.mrb[0].mxu0
    %2320 = vmatprep.mubr.bf16.mxu0 0
    %2321 = vmatmul.mubr.bf16.gmra.mrb[0].mxu0 %v2152
    %v2322 = vpop.f32.mrb[0].mxu0
    %v2323 = vadd.f32 0.0, %v2322
    %v2324 = vpop.f32.mrb[0].mxu0
    %v2325 = vpop.f32.mrb[0].mxu0
    %v2326 = vadd.f32 0.0, %v2325
    %v2327 = vpop.f32.mrb[0].mxu0
    %2328 = vmatprep.mubr.bf16.mxu0 0
    %2329 = vmatmul.mubr.bf16.gmra.mrb[0].mxu0 %v2153
    %v2330 = vpop.f32.mrb[0].mxu0
    %v2331 = vadd.f32 0.0, %v2330
    %v2332 = vpop.f32.mrb[0].mxu0
    %v2333 = vpop.f32.mrb[0].mxu0
    %v2334 = vadd.f32 0.0, %v2333
    %v2335 = vpop.f32.mrb[0].mxu0
    %2336 = vmatprep.mubr.bf16.mxu0 0
    %2337 = vmatmul.mubr.bf16.gmra.mrb[0].mxu0 %v2154
    %v2338 = vpop.f32.mrb[0].mxu0
    %v2339 = vadd.f32 0.0, %v2338
    %v2340 = vpop.f32.mrb[0].mxu0
    %v2341 = vpop.f32.mrb[0].mxu0
    %v2342 = vadd.f32 0.0, %v2341
    %v2343 = vpop.f32.mrb[0].mxu0
    %2344 = vmatprep.mubr.bf16.mxu0 0
    %2345 = vmatmul.mubr.bf16.gmra.mrb[0].mxu0 %v2155
    %v2346 = vpop.f32.mrb[0].mxu0
    %v2347 = vadd.f32 0.0, %v2346
    %v2348 = vpop.f32.mrb[0].mxu0
    %v2349 = vpop.f32.mrb[0].mxu0
    %v2350 = vadd.f32 0.0, %v2349
    %v2351 = vpop.f32.mrb[0].mxu0
    %2352 = vmatprep.mubr.bf16.mxu0 0
    %2353 = vmatmul.mubr.bf16.gmra.mrb[0].mxu0 %v2156
    %v2354 = vpop.f32.mrb[0].mxu0
    %v2355 = vadd.f32 0.0, %v2354
    %v2356 = vpop.f32.mrb[0].mxu0
    %v2357 = vpop.f32.mrb[0].mxu0
    %v2358 = vadd.f32 0.0, %v2357
    %v2359 = vpop.f32.mrb[0].mxu0
    %2360 = vmatprep.mubr.bf16.mxu0 0
    %2361 = vmatmul.mubr.bf16.gmra.mrb[0].mxu0 %v2157
    %v2362 = vpop.f32.mrb[0].mxu0
    %v2363 = vadd.f32 0.0, %v2362
    %v2364 = vpop.f32.mrb[0].mxu0
    %v2365 = vpop.f32.mrb[0].mxu0
    %v2366 = vadd.f32 0.0, %v2365
    %v2367 = vpop.f32.mrb[0].mxu0
    %2368 = vmatprep.mubr.bf16.mxu0 0
    %2369 = vmatmul.mubr.bf16.gmra.mrb[0].mxu0 %v2158
    %v2370 = vpop.f32.mrb[0].mxu0
    %v2371 = vadd.f32 0.0, %v2370
    %v2372 = vpop.f32.mrb[0].mxu0
    %v2373 = vpop.f32.mrb[0].mxu0
    %v2374 = vadd.f32 0.0, %v2373
    %v2375 = vpop.f32.mrb[0].mxu0
    %2376 = vmatprep.mubr.bf16.mxu0 0
    %2377 = vmatmul.mubr.bf16.gmra.mrb[0].mxu0 %v2159
    %v2378 = vpop.f32.mrb[0].mxu0
    %v2379 = vadd.f32 0.0, %v2378
    %v2380 = vpop.f32.mrb[0].mxu0
    %v2381 = vpop.f32.mrb[0].mxu0
    %v2382 = vadd.f32 0.0, %v2381
    %v2383 = vpop.f32.mrb[0].mxu0
    %2384 = vdwg.mxu0
    %v2385 = vlaneseq
    %v2386 = vand.u32 %v2385, 127
    %vm2387 = vcmp.lt.s32.totalorder %v2386, 4
    %v2388 = vsel %vm2387, %v2259, -1e+30
    %v2389 = vsel %vm2387, %v2262, -1e+30
    %v2390 = vsel %vm2387, %v2267, -1e+30
    %v2391 = vsel %vm2387, %v2270, -1e+30
    %v2392 = vsel %vm2387, %v2275, -1e+30
    %v2393 = vsel %vm2387, %v2278, -1e+30
    %v2394 = vsel %vm2387, %v2283, -1e+30
    %v2395 = vsel %vm2387, %v2286, -1e+30
    %v2396 = vsel %vm2387, %v2291, -1e+30
    %v2397 = vsel %vm2387, %v2294, -1e+30
    %v2398 = vsel %vm2387, %v2299, -1e+30
    %v2399 = vsel %vm2387, %v2302, -1e+30
    %v2400 = vsel %vm2387, %v2307, -1e+30
    %v2401 = vsel %vm2387, %v2310, -1e+30
    %v2402 = vsel %vm2387, %v2315, -1e+30
    %v2403 = vsel %vm2387, %v2318, -1e+30
    %v2404 = vsel %vm2387, %v2323, -1e+30
    %v2405 = vsel %vm2387, %v2326, -1e+30
    %v2406 = vsel %vm2387, %v2331, -1e+30
    %v2407 = vsel %vm2387, %v2334, -1e+30
    %v2408 = vsel %vm2387, %v2339, -1e+30
    %v2409 = vsel %vm2387, %v2342, -1e+30
    %v2410 = vsel %vm2387, %v2347, -1e+30
    %v2411 = vsel %vm2387, %v2350, -1e+30
    %v2412 = vsel %vm2387, %v2355, -1e+30
    %v2413 = vsel %vm2387, %v2358, -1e+30
    %v2414 = vsel %vm2387, %v2363, -1e+30
    %v2415 = vsel %vm2387, %v2366, -1e+30
    %v2416 = vsel %vm2387, %v2371, -1e+30
    %v2417 = vsel %vm2387, %v2374, -1e+30
    %v2418 = vsel %vm2387, %v2379, -1e+30
    %v2419 = vsel %vm2387, %v2382, -1e+30
    %2420 = vmax.xlane.f32.xlu0 %v2388
    %v2421 = vpop.xlane.xlu0 %2420
    %2422 = vmax.xlane.f32.xlu0 %v2389
    %v2423 = vpop.xlane.xlu0 %2422
    %2424 = vmax.xlane.f32.xlu0 %v2390
    %v2425 = vpop.xlane.xlu0 %2424
    %2426 = vmax.xlane.f32.xlu0 %v2391
    %v2427 = vpop.xlane.xlu0 %2426
    %2428 = vmax.xlane.f32.xlu0 %v2392
    %v2429 = vpop.xlane.xlu0 %2428
    %2430 = vmax.xlane.f32.xlu0 %v2393
    %v2431 = vpop.xlane.xlu0 %2430
    %2432 = vmax.xlane.f32.xlu0 %v2394
    %v2433 = vpop.xlane.xlu0 %2432
    %2434 = vmax.xlane.f32.xlu0 %v2395
    %v2435 = vpop.xlane.xlu0 %2434
    %2436 = vmax.xlane.f32.xlu0 %v2396
    %v2437 = vpop.xlane.xlu0 %2436
    %2438 = vmax.xlane.f32.xlu0 %v2397
    %v2439 = vpop.xlane.xlu0 %2438
    %2440 = vmax.xlane.f32.xlu0 %v2398
    %v2441 = vpop.xlane.xlu0 %2440
    %2442 = vmax.xlane.f32.xlu0 %v2399
    %v2443 = vpop.xlane.xlu0 %2442
    %2444 = vmax.xlane.f32.xlu0 %v2400
    %v2445 = vpop.xlane.xlu0 %2444
    %2446 = vmax.xlane.f32.xlu0 %v2401
    %v2447 = vpop.xlane.xlu0 %2446
    %2448 = vmax.xlane.f32.xlu0 %v2402
    %v2449 = vpop.xlane.xlu0 %2448
    %2450 = vmax.xlane.f32.xlu0 %v2403
    %v2451 = vpop.xlane.xlu0 %2450
    %2452 = vmax.xlane.f32.xlu0 %v2404
    %v2453 = vpop.xlane.xlu0 %2452
    %2454 = vmax.xlane.f32.xlu0 %v2405
    %v2455 = vpop.xlane.xlu0 %2454
    %2456 = vmax.xlane.f32.xlu0 %v2406
    %v2457 = vpop.xlane.xlu0 %2456
    %2458 = vmax.xlane.f32.xlu0 %v2407
    %v2459 = vpop.xlane.xlu0 %2458
    %2460 = vmax.xlane.f32.xlu0 %v2408
    %v2461 = vpop.xlane.xlu0 %2460
    %2462 = vmax.xlane.f32.xlu0 %v2409
    %v2463 = vpop.xlane.xlu0 %2462
    %2464 = vmax.xlane.f32.xlu0 %v2410
    %v2465 = vpop.xlane.xlu0 %2464
    %2466 = vmax.xlane.f32.xlu0 %v2411
    %v2467 = vpop.xlane.xlu0 %2466
    %2468 = vmax.xlane.f32.xlu0 %v2412
    %v2469 = vpop.xlane.xlu0 %2468
    %2470 = vmax.xlane.f32.xlu0 %v2413
    %v2471 = vpop.xlane.xlu0 %2470
    %2472 = vmax.xlane.f32.xlu0 %v2414
    %v2473 = vpop.xlane.xlu0 %2472
    %2474 = vmax.xlane.f32.xlu0 %v2415
    %v2475 = vpop.xlane.xlu0 %2474
    %2476 = vmax.xlane.f32.xlu0 %v2416
    %v2477 = vpop.xlane.xlu0 %2476
    %2478 = vmax.xlane.f32.xlu0 %v2417
    %v2479 = vpop.xlane.xlu0 %2478
    %2480 = vmax.xlane.f32.xlu0 %v2418
    %v2481 = vpop.xlane.xlu0 %2480
    %2482 = vmax.xlane.f32.xlu0 %v2419
    %v2483 = vpop.xlane.xlu0 %2482
    %v2484 = vsub.f32 %v2388, %v2421
    %v2485 = vsub.f32 %v2389, %v2423
    %v2486 = vsub.f32 %v2390, %v2425
    %v2487 = vsub.f32 %v2391, %v2427
    %v2488 = vsub.f32 %v2392, %v2429
    %v2489 = vsub.f32 %v2393, %v2431
    %v2490 = vsub.f32 %v2394, %v2433
    %v2491 = vsub.f32 %v2395, %v2435
    %v2492 = vsub.f32 %v2396, %v2437
    %v2493 = vsub.f32 %v2397, %v2439
    %v2494 = vsub.f32 %v2398, %v2441
    %v2495 = vsub.f32 %v2399, %v2443
    %v2496 = vsub.f32 %v2400, %v2445
    %v2497 = vsub.f32 %v2401, %v2447
    %v2498 = vsub.f32 %v2402, %v2449
    %v2499 = vsub.f32 %v2403, %v2451
    %v2500 = vsub.f32 %v2404, %v2453
    %v2501 = vsub.f32 %v2405, %v2455
    %v2502 = vsub.f32 %v2406, %v2457
    %v2503 = vsub.f32 %v2407, %v2459
    %v2504 = vsub.f32 %v2408, %v2461
    %v2505 = vsub.f32 %v2409, %v2463
    %v2506 = vsub.f32 %v2410, %v2465
    %v2507 = vsub.f32 %v2411, %v2467
    %v2508 = vsub.f32 %v2412, %v2469
    %v2509 = vsub.f32 %v2413, %v2471
    %v2510 = vsub.f32 %v2414, %v2473
    %v2511 = vsub.f32 %v2415, %v2475
    %v2512 = vsub.f32 %v2416, %v2477
    %v2513 = vsub.f32 %v2417, %v2479
    %v2514 = vsub.f32 %v2418, %v2481
    %v2515 = vsub.f32 %v2419, %v2483
    %v2516 = vmul.f32 %v2484, 1.442695
    %v2517 = vpow.pop %v2516
    %v2518 = vmul.f32 %v2485, 1.442695
    %v2519 = vpow.pop %v2518
    %v2520 = vmul.f32 %v2486, 1.442695
    %v2521 = vpow.pop %v2520
    %v2522 = vmul.f32 %v2487, 1.442695
    %v2523 = vpow.pop %v2522
    %v2524 = vmul.f32 %v2488, 1.442695
    %v2525 = vpow.pop %v2524
    %v2526 = vmul.f32 %v2489, 1.442695
    %v2527 = vpow.pop %v2526
    %v2528 = vmul.f32 %v2490, 1.442695
    %v2529 = vpow.pop %v2528
    %v2530 = vmul.f32 %v2491, 1.442695
    %v2531 = vpow.pop %v2530
    %v2532 = vmul.f32 %v2492, 1.442695
    %v2533 = vpow.pop %v2532
    %v2534 = vmul.f32 %v2493, 1.442695
    %v2535 = vpow.pop %v2534
    %v2536 = vmul.f32 %v2494, 1.442695
    %v2537 = vpow.pop %v2536
    %v2538 = vmul.f32 %v2495, 1.442695
    %v2539 = vpow.pop %v2538
    %v2540 = vmul.f32 %v2496, 1.442695
    %v2541 = vpow.pop %v2540
    %v2542 = vmul.f32 %v2497, 1.442695
    %v2543 = vpow.pop %v2542
    %v2544 = vmul.f32 %v2498, 1.442695
    %v2545 = vpow.pop %v2544
    %v2546 = vmul.f32 %v2499, 1.442695
    %v2547 = vpow.pop %v2546
    %v2548 = vmul.f32 %v2500, 1.442695
    %v2549 = vpow.pop %v2548
    %v2550 = vmul.f32 %v2501, 1.442695
    %v2551 = vpow.pop %v2550
    %v2552 = vmul.f32 %v2502, 1.442695
    %v2553 = vpow.pop %v2552
    %v2554 = vmul.f32 %v2503, 1.442695
    %v2555 = vpow.pop %v2554
    %v2556 = vmul.f32 %v2504, 1.442695
    %v2557 = vpow.pop %v2556
    %v2558 = vmul.f32 %v2505, 1.442695
    %v2559 = vpow.pop %v2558
    %v2560 = vmul.f32 %v2506, 1.442695
    %v2561 = vpow.pop %v2560
    %v2562 = vmul.f32 %v2507, 1.442695
    %v2563 = vpow.pop %v2562
    %v2564 = vmul.f32 %v2508, 1.442695
    %v2565 = vpow.pop %v2564
    %v2566 = vmul.f32 %v2509, 1.442695
    %v2567 = vpow.pop %v2566
    %v2568 = vmul.f32 %v2510, 1.442695
    %v2569 = vpow.pop %v2568
    %v2570 = vmul.f32 %v2511, 1.442695
    %v2571 = vpow.pop %v2570
    %v2572 = vmul.f32 %v2512, 1.442695
    %v2573 = vpow.pop %v2572
    %v2574 = vmul.f32 %v2513, 1.442695
    %v2575 = vpow.pop %v2574
    %v2576 = vmul.f32 %v2514, 1.442695
    %v2577 = vpow.pop %v2576
    %v2578 = vmul.f32 %v2515, 1.442695
    %v2579 = vpow.pop %v2578
    %2580 = vadd.xlane.f32.xlu0 %v2517
    %v2581 = vpop.xlane.xlu0 %2580
    %2582 = vadd.xlane.f32.xlu0 %v2519
    %v2583 = vpop.xlane.xlu0 %2582
    %2584 = vadd.xlane.f32.xlu0 %v2521
    %v2585 = vpop.xlane.xlu0 %2584
    %2586 = vadd.xlane.f32.xlu0 %v2523
    %v2587 = vpop.xlane.xlu0 %2586
    %2588 = vadd.xlane.f32.xlu0 %v2525
    %v2589 = vpop.xlane.xlu0 %2588
    %2590 = vadd.xlane.f32.xlu0 %v2527
    %v2591 = vpop.xlane.xlu0 %2590
    %2592 = vadd.xlane.f32.xlu0 %v2529
    %v2593 = vpop.xlane.xlu0 %2592
    %2594 = vadd.xlane.f32.xlu0 %v2531
    %v2595 = vpop.xlane.xlu0 %2594
    %2596 = vadd.xlane.f32.xlu0 %v2533
    %v2597 = vpop.xlane.xlu0 %2596
    %2598 = vadd.xlane.f32.xlu0 %v2535
    %v2599 = vpop.xlane.xlu0 %2598
    %2600 = vadd.xlane.f32.xlu0 %v2537
    %v2601 = vpop.xlane.xlu0 %2600
    %2602 = vadd.xlane.f32.xlu0 %v2539
    %v2603 = vpop.xlane.xlu0 %2602
    %2604 = vadd.xlane.f32.xlu0 %v2541
    %v2605 = vpop.xlane.xlu0 %2604
    %2606 = vadd.xlane.f32.xlu0 %v2543
    %v2607 = vpop.xlane.xlu0 %2606
    %2608 = vadd.xlane.f32.xlu0 %v2545
    %v2609 = vpop.xlane.xlu0 %2608
    %2610 = vadd.xlane.f32.xlu0 %v2547
    %v2611 = vpop.xlane.xlu0 %2610
    %2612 = vadd.xlane.f32.xlu0 %v2549
    %v2613 = vpop.xlane.xlu0 %2612
    %2614 = vadd.xlane.f32.xlu0 %v2551
    %v2615 = vpop.xlane.xlu0 %2614
    %2616 = vadd.xlane.f32.xlu0 %v2553
    %v2617 = vpop.xlane.xlu0 %2616
    %2618 = vadd.xlane.f32.xlu0 %v2555
    %v2619 = vpop.xlane.xlu0 %2618
    %2620 = vadd.xlane.f32.xlu0 %v2557
    %v2621 = vpop.xlane.xlu0 %2620
    %2622 = vadd.xlane.f32.xlu0 %v2559
    %v2623 = vpop.xlane.xlu0 %2622
    %2624 = vadd.xlane.f32.xlu0 %v2561
    %v2625 = vpop.xlane.xlu0 %2624
    %2626 = vadd.xlane.f32.xlu0 %v2563
    %v2627 = vpop.xlane.xlu0 %2626
    %2628 = vadd.xlane.f32.xlu0 %v2565
    %v2629 = vpop.xlane.xlu0 %2628
    %2630 = vadd.xlane.f32.xlu0 %v2567
    %v2631 = vpop.xlane.xlu0 %2630
    %2632 = vadd.xlane.f32.xlu0 %v2569
    %v2633 = vpop.xlane.xlu0 %2632
    %2634 = vadd.xlane.f32.xlu0 %v2571
    %v2635 = vpop.xlane.xlu0 %2634
    %2636 = vadd.xlane.f32.xlu0 %v2573
    %v2637 = vpop.xlane.xlu0 %2636
    %2638 = vadd.xlane.f32.xlu0 %v2575
    %v2639 = vpop.xlane.xlu0 %2638
    %2640 = vadd.xlane.f32.xlu0 %v2577
    %v2641 = vpop.xlane.xlu0 %2640
    %2642 = vadd.xlane.f32.xlu0 %v2579
    %v2643 = vpop.xlane.xlu0 %2642
    %v2644 = vlog2.pop %v2581
    %v2645 = vmul.f32 %v2644, 0.6931472
    %v2646 = vlog2.pop %v2583
    %v2647 = vmul.f32 %v2646, 0.6931472
    %v2648 = vlog2.pop %v2585
    %v2649 = vmul.f32 %v2648, 0.6931472
    %v2650 = vlog2.pop %v2587
    %v2651 = vmul.f32 %v2650, 0.6931472
    %v2652 = vlog2.pop %v2589
    %v2653 = vmul.f32 %v2652, 0.6931472
    %v2654 = vlog2.pop %v2591
    %v2655 = vmul.f32 %v2654, 0.6931472
    %v2656 = vlog2.pop %v2593
    %v2657 = vmul.f32 %v2656, 0.6931472
    %v2658 = vlog2.pop %v2595
    %v2659 = vmul.f32 %v2658, 0.6931472
    %v2660 = vlog2.pop %v2597
    %v2661 = vmul.f32 %v2660, 0.6931472
    %v2662 = vlog2.pop %v2599
    %v2663 = vmul.f32 %v2662, 0.6931472
    %v2664 = vlog2.pop %v2601
    %v2665 = vmul.f32 %v2664, 0.6931472
    %v2666 = vlog2.pop %v2603
    %v2667 = vmul.f32 %v2666, 0.6931472
    %v2668 = vlog2.pop %v2605
    %v2669 = vmul.f32 %v2668, 0.6931472
    %v2670 = vlog2.pop %v2607
    %v2671 = vmul.f32 %v2670, 0.6931472
    %v2672 = vlog2.pop %v2609
    %v2673 = vmul.f32 %v2672, 0.6931472
    %v2674 = vlog2.pop %v2611
    %v2675 = vmul.f32 %v2674, 0.6931472
    %v2676 = vlog2.pop %v2613
    %v2677 = vmul.f32 %v2676, 0.6931472
    %v2678 = vlog2.pop %v2615
    %v2679 = vmul.f32 %v2678, 0.6931472
    %v2680 = vlog2.pop %v2617
    %v2681 = vmul.f32 %v2680, 0.6931472
    %v2682 = vlog2.pop %v2619
    %v2683 = vmul.f32 %v2682, 0.6931472
    %v2684 = vlog2.pop %v2621
    %v2685 = vmul.f32 %v2684, 0.6931472
    %v2686 = vlog2.pop %v2623
    %v2687 = vmul.f32 %v2686, 0.6931472
    %v2688 = vlog2.pop %v2625
    %v2689 = vmul.f32 %v2688, 0.6931472
    %v2690 = vlog2.pop %v2627
    %v2691 = vmul.f32 %v2690, 0.6931472
    %v2692 = vlog2.pop %v2629
    %v2693 = vmul.f32 %v2692, 0.6931472
    %v2694 = vlog2.pop %v2631
    %v2695 = vmul.f32 %v2694, 0.6931472
    %v2696 = vlog2.pop %v2633
    %v2697 = vmul.f32 %v2696, 0.6931472
    %v2698 = vlog2.pop %v2635
    %v2699 = vmul.f32 %v2698, 0.6931472
    %v2700 = vlog2.pop %v2637
    %v2701 = vmul.f32 %v2700, 0.6931472
    %v2702 = vlog2.pop %v2639
    %v2703 = vmul.f32 %v2702, 0.6931472
    %v2704 = vlog2.pop %v2641
    %v2705 = vmul.f32 %v2704, 0.6931472
    %v2706 = vlog2.pop %v2643
    %v2707 = vmul.f32 %v2706, 0.6931472
    %v2708 = vadd.f32 %v2421, %v2645
    %v2709 = vadd.f32 %v2423, %v2647
    %v2710 = vadd.f32 %v2425, %v2649
    %v2711 = vadd.f32 %v2427, %v2651
    %v2712 = vadd.f32 %v2429, %v2653
    %v2713 = vadd.f32 %v2431, %v2655
    %v2714 = vadd.f32 %v2433, %v2657
    %v2715 = vadd.f32 %v2435, %v2659
    %v2716 = vadd.f32 %v2437, %v2661
    %v2717 = vadd.f32 %v2439, %v2663
    %v2718 = vadd.f32 %v2441, %v2665
    %v2719 = vadd.f32 %v2443, %v2667
    %v2720 = vadd.f32 %v2445, %v2669
    %v2721 = vadd.f32 %v2447, %v2671
    %v2722 = vadd.f32 %v2449, %v2673
    %v2723 = vadd.f32 %v2451, %v2675
    %v2724 = vadd.f32 %v2453, %v2677
    %v2725 = vadd.f32 %v2455, %v2679
    %v2726 = vadd.f32 %v2457, %v2681
    %v2727 = vadd.f32 %v2459, %v2683
    %v2728 = vadd.f32 %v2461, %v2685
    %v2729 = vadd.f32 %v2463, %v2687
    %v2730 = vadd.f32 %v2465, %v2689
    %v2731 = vadd.f32 %v2467, %v2691
    %v2732 = vadd.f32 %v2469, %v2693
    %v2733 = vadd.f32 %v2471, %v2695
    %v2734 = vadd.f32 %v2473, %v2697
    %v2735 = vadd.f32 %v2475, %v2699
    %v2736 = vadd.f32 %v2477, %v2701
    %v2737 = vadd.f32 %v2479, %v2703
    %v2738 = vadd.f32 %v2481, %v2705
    %v2739 = vadd.f32 %v2483, %v2707
    %v2740 = vsub.f32 %v2388, %v2708
    %v2741 = vsub.f32 %v2389, %v2709
    %v2742 = vsub.f32 %v2390, %v2710
    %v2743 = vsub.f32 %v2391, %v2711
    %v2744 = vsub.f32 %v2392, %v2712
    %v2745 = vsub.f32 %v2393, %v2713
    %v2746 = vsub.f32 %v2394, %v2714
    %v2747 = vsub.f32 %v2395, %v2715
    %v2748 = vsub.f32 %v2396, %v2716
    %v2749 = vsub.f32 %v2397, %v2717
    %v2750 = vsub.f32 %v2398, %v2718
    %v2751 = vsub.f32 %v2399, %v2719
    %v2752 = vsub.f32 %v2400, %v2720
    %v2753 = vsub.f32 %v2401, %v2721
    %v2754 = vsub.f32 %v2402, %v2722
    %v2755 = vsub.f32 %v2403, %v2723
    %v2756 = vsub.f32 %v2404, %v2724
    %v2757 = vsub.f32 %v2405, %v2725
    %v2758 = vsub.f32 %v2406, %v2726
    %v2759 = vsub.f32 %v2407, %v2727
    %v2760 = vsub.f32 %v2408, %v2728
    %v2761 = vsub.f32 %v2409, %v2729
    %v2762 = vsub.f32 %v2410, %v2730
    %v2763 = vsub.f32 %v2411, %v2731
    %v2764 = vsub.f32 %v2412, %v2732
    %v2765 = vsub.f32 %v2413, %v2733
    %v2766 = vsub.f32 %v2414, %v2734
    %v2767 = vsub.f32 %v2415, %v2735
    %v2768 = vsub.f32 %v2416, %v2736
    %v2769 = vsub.f32 %v2417, %v2737
    %v2770 = vsub.f32 %v2418, %v2738
    %v2771 = vsub.f32 %v2419, %v2739
    %2772 = vst [vmem:[%s7] sm:$0xff] %v2740
    %2773 = vst [vmem:[%s7 + $0x8] sm:$0xff] %v2741
    %2774 = vst [vmem:[%s7 + $0x10] sm:$0xff] %v2742
    %2775 = vst [vmem:[%s7 + $0x18] sm:$0xff] %v2743
    %2776 = vst [vmem:[%s7 + $0x20] sm:$0xff] %v2744
    %2777 = vst [vmem:[%s7 + $0x28] sm:$0xff] %v2745
    %2778 = vst [vmem:[%s7 + $0x30] sm:$0xff] %v2746
    %2779 = vst [vmem:[%s7 + $0x38] sm:$0xff] %v2747
    %2780 = vst [vmem:[%s7 + $0x40] sm:$0xff] %v2748
    %2781 = vst [vmem:[%s7 + $0x48] sm:$0xff] %v2749
    %2782 = vst [vmem:[%s7 + $0x50] sm:$0xff] %v2750
    %2783 = vst [vmem:[%s7 + $0x58] sm:$0xff] %v2751
    %2784 = vst [vmem:[%s7 + $0x60] sm:$0xff] %v2752
    %2785 = vst [vmem:[%s7 + $0x68] sm:$0xff] %v2753
    %2786 = vst [vmem:[%s7 + $0x70] sm:$0xff] %v2754
    %2787 = vst [vmem:[%s7 + $0x78] sm:$0xff] %v2755
    %2788 = vst [vmem:[%s7 + $0x80] sm:$0xff] %v2756
    %2789 = vst [vmem:[%s7 + $0x88] sm:$0xff] %v2757
    %2790 = vst [vmem:[%s7 + $0x90] sm:$0xff] %v2758
    %2791 = vst [vmem:[%s7 + $0x98] sm:$0xff] %v2759
    %2792 = vst [vmem:[%s7 + $0xa0] sm:$0xff] %v2760
    %2793 = vst [vmem:[%s7 + $0xa8] sm:$0xff] %v2761
    %2794 = vst [vmem:[%s7 + $0xb0] sm:$0xff] %v2762
    %2795 = vst [vmem:[%s7 + $0xb8] sm:$0xff] %v2763
    %2796 = vst [vmem:[%s7 + $0xc0] sm:$0xff] %v2764
    %2797 = vst [vmem:[%s7 + $0xc8] sm:$0xff] %v2765
    %2798 = vst [vmem:[%s7 + $0xd0] sm:$0xff] %v2766
    %2799 = vst [vmem:[%s7 + $0xd8] sm:$0xff] %v2767
    %2800 = vst [vmem:[%s7 + $0xe0] sm:$0xff] %v2768
    %2801 = vst [vmem:[%s7 + $0xe8] sm:$0xff] %v2769
    %2802 = vst [vmem:[%s7 + $0xf0] sm:$0xff] %v2770
    %2803 = vst [vmem:[%s7 + $0xf8] sm:$0xff] %v2771
    // Predicated region
    $region58: #{simple_gcn_forward.1} parent=1 // pred_check
      _
    $region59: #{simple_gcn_forward.1} parent=1 // pred_check_branch
      %2805 = sbr.rel (0) target = $region61
    $region60: #{simple_gcn_forward.1} parent=1 // pred_region
      _
    $region61: #{simple_gcn_forward.1} parent=1 // pred_fallthru
      _
    // Predicated region
    $region62: #{simple_gcn_forward.1} parent=1 // pred_check
      _
    $region63: #{simple_gcn_forward.1} parent=1 // pred_check_branch
      %2807 = sbr.rel (0) target = $region65
    $region64: #{simple_gcn_forward.1} parent=1 // pred_region
      _
    $region65: #{simple_gcn_forward.1} parent=1 // pred_fallthru
      _
    %2808 = vsyncpa [#allocation3], 1
    %2809 = vsyncpa [#allocation5], 1
    %2810 = vsyncpa [#allocation8], 1
    %2811 = vsyncpa [#allocation11], 1

</llo_original>
